<compile_context>
chip_gen: v7x
topology: tpu7x:2x2x1
jax: 0.10.0
libtpu: 0.0.40
codegen_flags: <defaults>
</compile_context>

<pallas_src>
import functools

import jax
import jax.numpy as jnp
from jax.experimental import pallas as pl
from jax.experimental.pallas import tpu as pltpu


def biaffine_attention_kernel(head_ref, dep_ref, w2_ref, u1_ref, u2_ref, b_ref,
                              g_ref, gt_ref, out_ref, *,
                              block_batch, seq_len, num_label, h2, out_mode):
    bt, S, L, H2 = block_batch, seq_len, num_label, h2
    N = bt * S                 # flattened MXU rows this grid step
    LH = L * H2                # "all labels" lane width

    # Flatten (batch, seq) -> rows.  Layout-preserving when S % 8 == 0 (sublane merge);
    # still correct otherwise (a relayout copy is materialized).
    head_flat = head_ref[...].reshape(N, head_ref.shape[-1])      # [N, H1], operand dtype
    dep_flat = dep_ref[...].reshape(N, H2)                        # [N, H2], operand dtype
    dep_f32 = dep_flat.astype(jnp.float32)
    dep_tiled = jnp.tile(dep_f32, (1, L))                         # [N, LH]

    # Bilinear "head @ W[l] for every label" in one lane-aligned MXU matmul.
    hd = jnp.dot(head_flat, w2_ref[...],
                 preferred_element_type=jnp.float32)              # [N, LH]

    # Linear term of nn.Linear(concat(head, dep), bias=False) as two tiny L-wide matmuls.
    lin = (jnp.dot(head_flat, u1_ref[...], preferred_element_type=jnp.float32)
           + jnp.dot(dep_flat, u2_ref[...], preferred_element_type=jnp.float32))  # [N, L]

    # bil[n,l] = sum_j hd[n, l*H2+j] * dep[n, j]   (per-label segment sum on the MXU).
    prod = (hd * dep_tiled).astype(g_ref.dtype)
    bil = jnp.dot(prod, g_ref[...], preferred_element_type=jnp.float32)            # [N, L]

    scores = bil + lin + b_ref[...]                               # [N, L], bias broadcasts

    # softmax over the seq axis  (== torch .transpose(1,2) + softmax(dim=-1)).
    scores3 = scores.reshape(bt, S, L)
    m = jnp.max(scores3, axis=1, keepdims=True)
    e = jnp.exp(scores3 - m)
    denom = jnp.sum(e, axis=1, keepdims=True)
    inv = pl.reciprocal(denom, approx=True)                       # EUP slot
    inv = inv * (2.0 - denom * inv)                               # one Newton step -> ~f32
    att3 = e * inv                                                # [bt, S, L]

    if out_mode == "selector":
        # out[b, l*H2+h] = sum_s att[b,s,l] * dep[b,s,h]; broadcast att over each label's
        # H2 lanes via G^T, multiply by lane-tiled dep, reduce over seq (sublane axis).
        att_b = jnp.dot(att3.reshape(N, L).astype(gt_ref.dtype), gt_ref[...],
                        preferred_element_type=jnp.float32)                        # [N, LH]
        out_flat = jnp.sum((att_b * dep_tiled).reshape(bt, S, LH), axis=1)         # [bt, LH]
        out_ref[0, :, :] = out_flat.astype(out_ref.dtype)
    else:
        # Production path: batched contraction over seq (K = S), no [N, LH] temporaries.
        out3 = jax.lax.dot_general(
            att3, dep_f32.reshape(bt, S, H2),
            dimension_numbers=(((1,), (1,)), ((0,), (0,))),
            preferred_element_type=jnp.float32)                                    # [bt, L, H2]
        out_ref[0, :, :, :] = out3.astype(out_ref.dtype)


def _tpu_vmem_info():
    """Best-effort (physical VMEM bytes, v7x-like?) query; safe defaults off-TPU."""
    phys = 128 << 20
    try:
        info = pltpu.get_tpu_info()
        phys = int(getattr(info, "vmem_capacity_bytes", phys))
    except Exception:
        pass
    small_vmem = phys <= (96 << 20)          # v7x has 64 MiB per TC; v5e/v6e have 128 MiB
    try:
        if "7" in jax.devices()[0].device_kind:
            small_vmem = True
    except Exception:
        pass
    return phys, small_vmem


def _pick_block_batch(batch, seq, lh, *, small_vmem):
    """Coarsen the batch axis so each grid step feeds many MXU rows, bounded so the
    ~5 live [N, L*H2] f32 temporaries fit the scoped-VMEM budget of the chip."""
    row_cap = 256 if small_vmem else 512
    temp_budget = (8 << 20) if small_vmem else (24 << 20)
    row_cap = min(row_cap, max(8, temp_budget // max(1, 5 * 4 * lh)))
    bt = max(1, min(batch, row_cap // max(1, seq)))
    # Only a dual-TensorCore chip (v7x) gains from >=2 grid steps on the "parallel" batch
    # axis; v5e/v6e have one TC, so splitting only doubles the ~0.35us per-step overhead.
    if small_vmem and bt >= batch and batch >= 2:
        bt = -(-batch // 2)
    return bt


def _vmem_limit_bytes(bt, seq, h1, h2, num_label, dsize, out_mode, phys):
    """Derive the scoped-VMEM request from actual block sizes instead of a fixed 32 MiB."""
    lh, n = num_label * h2, bt * seq
    act = 2 * bt * seq * (h1 + h2) * dsize                        # double-buffered head/dep
    wts = (h1 * lh + (h1 + h2) * num_label + 2 * lh * num_label) * dsize + 4 * num_label
    out = 2 * bt * lh * dsize                                     # double-buffered output
    tmp = (5 if out_mode == "selector" else 4) * n * lh * 4       # live f32 temporaries
    need = int(1.3 * (act + wts + out + tmp)) + (4 << 20)
    return max(32 << 20, min(need, int(phys * 0.70)))


def biaffine_attention(head, dep, w_bil, b_bil, w_lin, *,
                       block_batch=None, selector_dtype=None):
    """head: [B,S,H1], dep: [B,S,H2], w_bil: [L,H1,H2], b_bil: [L], w_lin: [L,H1+H2].
    Returns [B, L, H2] (matches torch.bmm(softmax(score), dep))."""
    B, S, H1 = head.shape
    H2 = dep.shape[-1]
    L = w_bil.shape[0]
    LH = L * H2
    cdtype = head.dtype                       # MXU operand dtype (bf16 inputs stay bf16)
    dsize = jnp.dtype(cdtype).itemsize

    phys_vmem, small_vmem = _tpu_vmem_info()
    bt = (_pick_block_batch(B, S, LH, small_vmem=small_vmem)
          if block_batch is None else block_batch)
    grid_b = -(-B // bt)                      # ceil(B / bt)
    B_pad = grid_b * bt

    # Pad batch instead of requiring bt | B; padded rows give finite scores (bias only),
    # a well-defined softmax and a zero output row, and are sliced off below.
    head_p, dep_p = head, dep
    if B_pad != B:
        pad = B_pad - B
        head_p = jnp.concatenate([head, jnp.zeros((pad, S, H1), head.dtype)], axis=0)
        dep_p = jnp.concatenate([dep, jnp.zeros((pad, S, H2), dep.dtype)], axis=0)

    # ---- Parameter plumbing (plain JAX, done once) ----
    # W2[i, l*H2+j] = w_bil[l, i, j]  -> head @ W2 gives all labels' bilinear forms; the
    # linear layer is kept as two small [*, L] matmuls so W2's output width stays L*H2.
    w2 = jnp.transpose(w_bil, (1, 0, 2)).reshape(H1, LH).astype(cdtype)    # [H1, LH]
    u1 = jnp.transpose(w_lin[:, :H1]).astype(cdtype)                       # [H1, L]
    u2 = jnp.transpose(w_lin[:, H1:]).astype(cdtype)                       # [H2, L]
    bias2d = b_bil.reshape(1, L).astype(jnp.float32)

    # 0/1 selector: G[k, l] = 1 iff k // H2 == l (per-label segment sum; transposed form
    # broadcasts att weights over each label's H2 lanes).  Built in the MXU operand dtype.
    sel_dtype = cdtype if selector_dtype is None else selector_dtype
    g = (jnp.arange(LH)[:, None] // H2 == jnp.arange(L)[None, :]).astype(sel_dtype)
    gt = jnp.transpose(g)                                                  # [L, LH]

    # Selector trick only while the per-step [N, LH] f32 temp is tiny (overhead-bound
    # regime); switch to the batched dot_general contraction at production S/H2.
    out_mode = "selector" if bt * S * LH * 4 <= (1 << 20) else "bmm"

    vmem_limit = _vmem_limit_bytes(bt, S, H1, H2, L, dsize, out_mode, phys_vmem)

    kernel = functools.partial(biaffine_attention_kernel, block_batch=bt, seq_len=S,
                               num_label=L, h2=H2, out_mode=out_mode)

    def _call(single_buffer_weights):
        wkw = {}
        if single_buffer_weights and getattr(pl, "Buffered", None) is not None:
            # Grid-invariant parameter blocks: no double buffering needed.
            wkw = dict(pipeline_mode=pl.Buffered(1))
        in_specs = [
            pl.BlockSpec((bt, S, H1), lambda b: (b, 0, 0)),       # head block
            pl.BlockSpec((bt, S, H2), lambda b: (b, 0, 0)),       # dep block
            pl.BlockSpec((H1, LH), lambda b: (0, 0), **wkw),      # bilinear W (all labels)
            pl.BlockSpec((H1, L), lambda b: (0, 0), **wkw),       # linear W (head half)
            pl.BlockSpec((H2, L), lambda b: (0, 0), **wkw),       # linear W (dep half)
            pl.BlockSpec((1, L), lambda b: (0, 0), **wkw),        # bilinear bias
            pl.BlockSpec((LH, L), lambda b: (0, 0), **wkw),       # selector G
            pl.BlockSpec((L, LH), lambda b: (0, 0), **wkw),       # selector G^T
        ]
        if out_mode == "selector":
            out_shape = jax.ShapeDtypeStruct((grid_b, bt, LH), cdtype)
            out_spec = pl.BlockSpec((1, bt, LH), lambda b: (b, 0, 0))
        else:
            out_shape = jax.ShapeDtypeStruct((grid_b, bt, L, H2), cdtype)
            out_spec = pl.BlockSpec((1, bt, L, H2), lambda b: (b, 0, 0, 0))
        return pl.pallas_call(
            kernel,
            out_shape=out_shape,
            grid_spec=pltpu.PrefetchScalarGridSpec(
                num_scalar_prefetch=0,
                grid=(grid_b,),
                in_specs=in_specs,
                out_specs=out_spec),
            compiler_params=pltpu.CompilerParams(
                dimension_semantics=("parallel",),
                vmem_limit_bytes=vmem_limit),
        )(head_p, dep_p, w2, u1, u2, bias2d, g, gt)

    try:
        out_raw = _call(True)
    except Exception:
        # Fallback for JAX builds that reject pipeline_mode on grid-level BlockSpecs.
        out_raw = _call(False)

    return out_raw.reshape(B_pad, L, H2)[:B]


def reference(head, dep, w_bil, b_bil, w_lin):
    bil = jnp.einsum('bsi,lij,bsj->bsl', head, w_bil, dep) + b_bil
    lin = jnp.einsum('bsk,lk->bsl', jnp.concatenate([head, dep], axis=-1), w_lin)
    score = jnp.transpose(bil + lin, (0, 2, 1))          # [B, L, S]
    att = jax.nn.softmax(score, axis=-1)
    return jnp.einsum('bls,bsh->blh', att, dep)


if __name__ == "__main__":
    B, S, H1, H2, L = 4, 8, 32, 32, 4   # L*H2 = 128 -> lane-dense output slab

    key = jax.random.PRNGKey(0)
    k_head, k_dep, k_w, k_b, k_lin = jax.random.split(key, 5)

    head = jax.random.normal(k_head, (B, S, H1), jnp.float32)
    dep = jax.random.normal(k_dep, (B, S, H2), jnp.float32)

    # Deterministic synthetic parameters (PyTorch-style uniform init bounds).
    bound_bil = 1.0 / (H1 ** 0.5)
    w_bil = jax.random.uniform(k_w, (L, H1, H2), jnp.float32, -bound_bil, bound_bil)
    b_bil = jax.random.uniform(k_b, (L,), jnp.float32, -bound_bil, bound_bil)
    bound_lin = 1.0 / ((H1 + H2) ** 0.5)
    w_lin = jax.random.uniform(k_lin, (L, H1 + H2), jnp.float32, -bound_lin, bound_lin)

    out = biaffine_attention(head, dep, w_bil, b_bil, w_lin)
    out = jax.block_until_ready(out)

    ref = reference(head, dep, w_bil, b_bil, w_lin)
    assert out.shape == (B, L, H2)
    # Tolerance 1e-3: approx-reciprocal (+1 Newton step) softmax and MXU f32 matmul passes.
    assert jnp.allclose(out, ref, atol=1e-3, rtol=1e-3), \
        f"max abs err {jnp.max(jnp.abs(out - ref))}"

    print("KERNEL_OK")
</pallas_src>

<mosaic_0001>
module attributes {stable_mosaic.version = 11 : i64} {
  func.func @biaffine_attention_kernel(%arg0: i32, %arg1: memref<4x8x32xf32, #tpu.memory_space<vmem>>, %arg2: memref<4x8x32xf32, #tpu.memory_space<vmem>>, %arg3: memref<32x128xf32, #tpu.memory_space<vmem>>, %arg4: memref<32x4xf32, #tpu.memory_space<vmem>>, %arg5: memref<32x4xf32, #tpu.memory_space<vmem>>, %arg6: memref<1x4xf32, #tpu.memory_space<vmem>>, %arg7: memref<128x4xf32, #tpu.memory_space<vmem>>, %arg8: memref<4x128xf32, #tpu.memory_space<vmem>>, %arg9: memref<1x4x128xf32, #tpu.memory_space<vmem>>) attributes {dimension_semantics = [#tpu.dimension_semantics<parallel>], iteration_bounds = array<i64: 1>, scalar_prefetch = 0 : i64, scratch_operands = 0 : i64, tpu.core_type = #tpu.core_type<tc>, window_params = [{transform_indices = @transform_0, window_bounds = array<i64: 4, 8, 32>}, {transform_indices = @transform_1, window_bounds = array<i64: 4, 8, 32>}, {pipeline_mode = #tpu.pipeline_mode<synchronous>, transform_indices = @transform_2, window_bounds = array<i64: 32, 128>}, {pipeline_mode = #tpu.pipeline_mode<synchronous>, transform_indices = @transform_3, window_bounds = array<i64: 32, 4>}, {pipeline_mode = #tpu.pipeline_mode<synchronous>, transform_indices = @transform_4, window_bounds = array<i64: 32, 4>}, {pipeline_mode = #tpu.pipeline_mode<synchronous>, transform_indices = @transform_5, window_bounds = array<i64: 1, 4>}, {pipeline_mode = #tpu.pipeline_mode<synchronous>, transform_indices = @transform_6, window_bounds = array<i64: 128, 4>}, {pipeline_mode = #tpu.pipeline_mode<synchronous>, transform_indices = @transform_7, window_bounds = array<i64: 4, 128>}, {transform_indices = @transform_8, window_bounds = array<i64: 1, 4, 128>}]} {
    %c0 = arith.constant 0 : index
    %c0_0 = arith.constant 0 : index
    %c0_1 = arith.constant 0 : index
    %0 = vector.load %arg1[%c0, %c0_0, %c0_1] : memref<4x8x32xf32, #tpu.memory_space<vmem>>, vector<4x8x32xf32>
    %1 = vector.shape_cast %0 : vector<4x8x32xf32> to vector<32x32xf32>
    %c0_2 = arith.constant 0 : index
    %c0_3 = arith.constant 0 : index
    %c0_4 = arith.constant 0 : index
    %2 = vector.load %arg2[%c0_2, %c0_3, %c0_4] : memref<4x8x32xf32, #tpu.memory_space<vmem>>, vector<4x8x32xf32>
    %3 = vector.shape_cast %2 : vector<4x8x32xf32> to vector<32x32xf32>
    %4 = tpu.concatenate %3, %3, %3, %3 in 1 : vector<32x32xf32>, vector<32x32xf32>, vector<32x32xf32>, vector<32x32xf32> -> vector<32x128xf32>
    %c0_5 = arith.constant 0 : index
    %c0_6 = arith.constant 0 : index
    %5 = vector.load %arg3[%c0_5, %c0_6] : memref<32x128xf32, #tpu.memory_space<vmem>>, vector<32x128xf32>
    %cst = arith.constant dense<0.000000e+00> : vector<32x128xf32>
    %6 = tpu.matmul %1, %5, %cst {dimension_numbers = #tpu.dot_dimension_numbers<[1], [0], [0], [1], [0, 0, 1, 1], [], []>} : vector<32x32xf32>, vector<32x128xf32>, vector<32x128xf32> -> vector<32x128xf32>
    %c0_7 = arith.constant 0 : index
    %c0_8 = arith.constant 0 : index
    %7 = vector.load %arg4[%c0_7, %c0_8] : memref<32x4xf32, #tpu.memory_space<vmem>>, vector<32x4xf32>
    %cst_9 = arith.constant dense<0.000000e+00> : vector<32x4xf32>
    %8 = tpu.matmul %1, %7, %cst_9 {dimension_numbers = #tpu.dot_dimension_numbers<[1], [0], [0], [1], [0, 0, 1, 1], [], []>} : vector<32x32xf32>, vector<32x4xf32>, vector<32x4xf32> -> vector<32x4xf32>
    %c0_10 = arith.constant 0 : index
    %c0_11 = arith.constant 0 : index
    %9 = vector.load %arg5[%c0_10, %c0_11] : memref<32x4xf32, #tpu.memory_space<vmem>>, vector<32x4xf32>
    %cst_12 = arith.constant dense<0.000000e+00> : vector<32x4xf32>
    %10 = tpu.matmul %3, %9, %cst_12 {dimension_numbers = #tpu.dot_dimension_numbers<[1], [0], [0], [1], [0, 0, 1, 1], [], []>} : vector<32x32xf32>, vector<32x4xf32>, vector<32x4xf32> -> vector<32x4xf32>
    %11 = arith.addf %8, %10 : vector<32x4xf32>
    %12 = arith.mulf %6, %4 : vector<32x128xf32>
    %c0_13 = arith.constant 0 : index
    %c0_14 = arith.constant 0 : index
    %13 = vector.load %arg7[%c0_13, %c0_14] : memref<128x4xf32, #tpu.memory_space<vmem>>, vector<128x4xf32>
    %cst_15 = arith.constant dense<0.000000e+00> : vector<32x4xf32>
    %14 = tpu.matmul %12, %13, %cst_15 {dimension_numbers = #tpu.dot_dimension_numbers<[1], [0], [0], [1], [0, 0, 1, 1], [], []>} : vector<32x128xf32>, vector<128x4xf32>, vector<32x4xf32> -> vector<32x4xf32>
    %15 = arith.addf %14, %11 : vector<32x4xf32>
    %c0_16 = arith.constant 0 : index
    %c0_17 = arith.constant 0 : index
    %16 = vector.load %arg6[%c0_16, %c0_17] : memref<1x4xf32, #tpu.memory_space<vmem>>, vector<1x4xf32>
    %17 = vector.broadcast %16 : vector<1x4xf32> to vector<32x4xf32>
    %18 = arith.addf %15, %17 : vector<32x4xf32>
    %19 = vector.shape_cast %18 : vector<32x4xf32> to vector<4x8x4xf32>
    %cst_18 = arith.constant dense<0xFF800000> : vector<4x4xf32>
    %20 = vector.multi_reduction <maximumf>, %19, %cst_18 [1] : vector<4x8x4xf32> to vector<4x4xf32>
    %21 = vector.shape_cast %20 : vector<4x4xf32> to vector<4x1x4xf32>
    %22 = vector.broadcast %21 : vector<4x1x4xf32> to vector<4x8x4xf32>
    %23 = arith.subf %19, %22 : vector<4x8x4xf32>
    %24 = math.exp %23 : vector<4x8x4xf32>
    %cst_19 = arith.constant dense<0.000000e+00> : vector<4x4xf32>
    %25 = vector.multi_reduction <add>, %24, %cst_19 [1] : vector<4x8x4xf32> to vector<4x4xf32>
    %26 = vector.shape_cast %25 : vector<4x4xf32> to vector<4x1x4xf32>
    %27 = tpu.reciprocal %26 {approx = true} : vector<4x1x4xf32> -> vector<4x1x4xf32>
    %28 = arith.mulf %26, %27 : vector<4x1x4xf32>
    %cst_20 = arith.constant 2.000000e+00 : f32
    %29 = vector.broadcast %cst_20 : f32 to vector<4x1x4xf32>
    %30 = arith.subf %29, %28 : vector<4x1x4xf32>
    %31 = arith.mulf %27, %30 : vector<4x1x4xf32>
    %32 = vector.broadcast %31 : vector<4x1x4xf32> to vector<4x8x4xf32>
    %33 = arith.mulf %24, %32 : vector<4x8x4xf32>
    %34 = vector.shape_cast %33 : vector<4x8x4xf32> to vector<32x4xf32>
    %c0_21 = arith.constant 0 : index
    %c0_22 = arith.constant 0 : index
    %35 = vector.load %arg8[%c0_21, %c0_22] : memref<4x128xf32, #tpu.memory_space<vmem>>, vector<4x128xf32>
    %cst_23 = arith.constant dense<0.000000e+00> : vector<32x128xf32>
    %36 = tpu.matmul %34, %35, %cst_23 {dimension_numbers = #tpu.dot_dimension_numbers<[1], [0], [0], [1], [0, 0, 1, 1], [], []>} : vector<32x4xf32>, vector<4x128xf32>, vector<32x128xf32> -> vector<32x128xf32>
    %37 = arith.mulf %36, %4 : vector<32x128xf32>
    %38 = vector.shape_cast %37 : vector<32x128xf32> to vector<4x8x128xf32>
    %cst_24 = arith.constant dense<0.000000e+00> : vector<4x128xf32>
    %39 = vector.multi_reduction <add>, %38, %cst_24 [1] : vector<4x8x128xf32> to vector<4x128xf32>
    %c0_25 = arith.constant 0 : index
    %c0_26 = arith.constant 0 : index
    %c0_27 = arith.constant 0 : index
    %40 = vector.load %arg9[%c0_25, %c0_26, %c0_27] : memref<1x4x128xf32, #tpu.memory_space<vmem>>, vector<1x4x128xf32>
    %41 = vector.shape_cast %40 : vector<1x4x128xf32> to vector<4x128xf32>
    %42 = vector.shape_cast %39 : vector<4x128xf32> to vector<1x4x128xf32>
    tpu.vector_store %arg9[%c0_25, %c0_26, %c0_27], %42 {strides = array<i32>} : memref<1x4x128xf32, #tpu.memory_space<vmem>>, vector<1x4x128xf32>,
    return
  }
  func.func @transform_0(%arg0: i32) -> (i32, i32, i32) {
    %c0_i32 = arith.constant 0 : i32
    %c0_i32_0 = arith.constant 0 : i32
    %c0_i32_1 = arith.constant 0 : i32
    return %arg0, %c0_i32, %c0_i32_0 : i32, i32, i32
  }
  func.func @transform_1(%arg0: i32) -> (i32, i32, i32) {
    %c0_i32 = arith.constant 0 : i32
    %c0_i32_0 = arith.constant 0 : i32
    %c0_i32_1 = arith.constant 0 : i32
    return %arg0, %c0_i32, %c0_i32_0 : i32, i32, i32
  }
  func.func @transform_2(%arg0: i32) -> (i32, i32) {
    %c0_i32 = arith.constant 0 : i32
    %c0_i32_0 = arith.constant 0 : i32
    %c0_i32_1 = arith.constant 0 : i32
    return %c0_i32, %c0_i32_0 : i32, i32
  }
  func.func @transform_3(%arg0: i32) -> (i32, i32) {
    %c0_i32 = arith.constant 0 : i32
    %c0_i32_0 = arith.constant 0 : i32
    %c0_i32_1 = arith.constant 0 : i32
    return %c0_i32, %c0_i32_0 : i32, i32
  }
  func.func @transform_4(%arg0: i32) -> (i32, i32) {
    %c0_i32 = arith.constant 0 : i32
    %c0_i32_0 = arith.constant 0 : i32
    %c0_i32_1 = arith.constant 0 : i32
    return %c0_i32, %c0_i32_0 : i32, i32
  }
  func.func @transform_5(%arg0: i32) -> (i32, i32) {
    %c0_i32 = arith.constant 0 : i32
    %c0_i32_0 = arith.constant 0 : i32
    %c0_i32_1 = arith.constant 0 : i32
    return %c0_i32, %c0_i32_0 : i32, i32
  }
  func.func @transform_6(%arg0: i32) -> (i32, i32) {
    %c0_i32 = arith.constant 0 : i32
    %c0_i32_0 = arith.constant 0 : i32
    %c0_i32_1 = arith.constant 0 : i32
    return %c0_i32, %c0_i32_0 : i32, i32
  }
  func.func @transform_7(%arg0: i32) -> (i32, i32) {
    %c0_i32 = arith.constant 0 : i32
    %c0_i32_0 = arith.constant 0 : i32
    %c0_i32_1 = arith.constant 0 : i32
    return %c0_i32, %c0_i32_0 : i32, i32
  }
  func.func @transform_8(%arg0: i32) -> (i32, i32, i32) {
    %c0_i32 = arith.constant 0 : i32
    %c0_i32_0 = arith.constant 0 : i32
    %c0_i32_1 = arith.constant 0 : i32
    return %arg0, %c0_i32, %c0_i32_0 : i32, i32, i32
  }
}

module attributes {stable_mosaic.version = 11 : i64} {
  func.func @biaffine_attention_kernel(%arg0: i32, %arg1: memref<4x8x32xf32, #tpu.memory_space<vmem>>, %arg2: memref<4x8x32xf32, #tpu.memory_space<vmem>>, %arg3: memref<32x128xf32, #tpu.memory_space<vmem>>, %arg4: memref<32x4xf32, #tpu.memory_space<vmem>>, %arg5: memref<32x4xf32, #tpu.memory_space<vmem>>, %arg6: memref<1x4xf32, #tpu.memory_space<vmem>>, %arg7: memref<128x4xf32, #tpu.memory_space<vmem>>, %arg8: memref<4x128xf32, #tpu.memory_space<vmem>>, %arg9: memref<1x4x128xf32, #tpu.memory_space<vmem>>) attributes {dimension_semantics = [#tpu.dimension_semantics<parallel>], iteration_bounds = array<i64: 1>, scalar_prefetch = 0 : i64, scratch_operands = 0 : i64, tpu.core_type = #tpu.core_type<tc>, window_params = [{transform_indices = @transform_0, window_bounds = array<i64: 4, 8, 32>}, {transform_indices = @transform_1, window_bounds = array<i64: 4, 8, 32>}, {pipeline_mode = #tpu.pipeline_mode<synchronous>, transform_indices = @transform_2, window_bounds = array<i64: 32, 128>}, {pipeline_mode = #tpu.pipeline_mode<synchronous>, transform_indices = @transform_3, window_bounds = array<i64: 32, 4>}, {pipeline_mode = #tpu.pipeline_mode<synchronous>, transform_indices = @transform_4, window_bounds = array<i64: 32, 4>}, {pipeline_mode = #tpu.pipeline_mode<synchronous>, transform_indices = @transform_5, window_bounds = array<i64: 1, 4>}, {pipeline_mode = #tpu.pipeline_mode<synchronous>, transform_indices = @transform_6, window_bounds = array<i64: 128, 4>}, {pipeline_mode = #tpu.pipeline_mode<synchronous>, transform_indices = @transform_7, window_bounds = array<i64: 4, 128>}, {transform_indices = @transform_8, window_bounds = array<i64: 1, 4, 128>}]} {
    %c0 = arith.constant 0 : index
    %c0_0 = arith.constant 0 : index
    %c0_1 = arith.constant 0 : index
    %0 = vector.load %arg1[%c0, %c0_0, %c0_1] : memref<4x8x32xf32, #tpu.memory_space<vmem>>, vector<4x8x32xf32>
    %1 = vector.shape_cast %0 : vector<4x8x32xf32> to vector<32x32xf32>
    %c0_2 = arith.constant 0 : index
    %c0_3 = arith.constant 0 : index
    %c0_4 = arith.constant 0 : index
    %2 = vector.load %arg2[%c0_2, %c0_3, %c0_4] : memref<4x8x32xf32, #tpu.memory_space<vmem>>, vector<4x8x32xf32>
    %3 = vector.shape_cast %2 : vector<4x8x32xf32> to vector<32x32xf32>
    %4 = tpu.concatenate %3, %3, %3, %3 in 1 : vector<32x32xf32>, vector<32x32xf32>, vector<32x32xf32>, vector<32x32xf32> -> vector<32x128xf32>
    %c0_5 = arith.constant 0 : index
    %c0_6 = arith.constant 0 : index
    %5 = vector.load %arg3[%c0_5, %c0_6] : memref<32x128xf32, #tpu.memory_space<vmem>>, vector<32x128xf32>
    %cst = arith.constant dense<0.000000e+00> : vector<32x128xf32>
    %6 = tpu.matmul %1, %5, %cst {dimension_numbers = #tpu.dot_dimension_numbers<[1], [0], [0], [1], [0, 0, 1, 1], [], []>} : vector<32x32xf32>, vector<32x128xf32>, vector<32x128xf32> -> vector<32x128xf32>
    %c0_7 = arith.constant 0 : index
    %c0_8 = arith.constant 0 : index
    %7 = vector.load %arg4[%c0_7, %c0_8] : memref<32x4xf32, #tpu.memory_space<vmem>>, vector<32x4xf32>
    %cst_9 = arith.constant dense<0.000000e+00> : vector<32x4xf32>
    %8 = tpu.matmul %1, %7, %cst_9 {dimension_numbers = #tpu.dot_dimension_numbers<[1], [0], [0], [1], [0, 0, 1, 1], [], []>} : vector<32x32xf32>, vector<32x4xf32>, vector<32x4xf32> -> vector<32x4xf32>
    %c0_10 = arith.constant 0 : index
    %c0_11 = arith.constant 0 : index
    %9 = vector.load %arg5[%c0_10, %c0_11] : memref<32x4xf32, #tpu.memory_space<vmem>>, vector<32x4xf32>
    %cst_12 = arith.constant dense<0.000000e+00> : vector<32x4xf32>
    %10 = tpu.matmul %3, %9, %cst_12 {dimension_numbers = #tpu.dot_dimension_numbers<[1], [0], [0], [1], [0, 0, 1, 1], [], []>} : vector<32x32xf32>, vector<32x4xf32>, vector<32x4xf32> -> vector<32x4xf32>
    %11 = arith.addf %8, %10 : vector<32x4xf32>
    %12 = arith.mulf %6, %4 : vector<32x128xf32>
    %c0_13 = arith.constant 0 : index
    %c0_14 = arith.constant 0 : index
    %13 = vector.load %arg7[%c0_13, %c0_14] : memref<128x4xf32, #tpu.memory_space<vmem>>, vector<128x4xf32>
    %cst_15 = arith.constant dense<0.000000e+00> : vector<32x4xf32>
    %14 = tpu.matmul %12, %13, %cst_15 {dimension_numbers = #tpu.dot_dimension_numbers<[1], [0], [0], [1], [0, 0, 1, 1], [], []>} : vector<32x128xf32>, vector<128x4xf32>, vector<32x4xf32> -> vector<32x4xf32>
    %15 = arith.addf %14, %11 : vector<32x4xf32>
    %c0_16 = arith.constant 0 : index
    %c0_17 = arith.constant 0 : index
    %16 = vector.load %arg6[%c0_16, %c0_17] : memref<1x4xf32, #tpu.memory_space<vmem>>, vector<1x4xf32>
    %17 = vector.broadcast %16 : vector<1x4xf32> to vector<32x4xf32>
    %18 = arith.addf %15, %17 : vector<32x4xf32>
    %19 = vector.shape_cast %18 : vector<32x4xf32> to vector<4x8x4xf32>
    %cst_18 = arith.constant dense<0xFF800000> : vector<4x4xf32>
    %20 = vector.multi_reduction <maximumf>, %19, %cst_18 [1] : vector<4x8x4xf32> to vector<4x4xf32>
    %21 = vector.shape_cast %20 : vector<4x4xf32> to vector<4x1x4xf32>
    %22 = vector.broadcast %21 : vector<4x1x4xf32> to vector<4x8x4xf32>
    %23 = arith.subf %19, %22 : vector<4x8x4xf32>
    %24 = math.exp %23 : vector<4x8x4xf32>
    %cst_19 = arith.constant dense<0.000000e+00> : vector<4x4xf32>
    %25 = vector.multi_reduction <add>, %24, %cst_19 [1] : vector<4x8x4xf32> to vector<4x4xf32>
    %26 = vector.shape_cast %25 : vector<4x4xf32> to vector<4x1x4xf32>
    %27 = tpu.reciprocal %26 {approx = true} : vector<4x1x4xf32> -> vector<4x1x4xf32>
    %28 = arith.mulf %26, %27 : vector<4x1x4xf32>
    %cst_20 = arith.constant 2.000000e+00 : f32
    %29 = vector.broadcast %cst_20 : f32 to vector<4x1x4xf32>
    %30 = arith.subf %29, %28 : vector<4x1x4xf32>
    %31 = arith.mulf %27, %30 : vector<4x1x4xf32>
    %32 = vector.broadcast %31 : vector<4x1x4xf32> to vector<4x8x4xf32>
    %33 = arith.mulf %24, %32 : vector<4x8x4xf32>
    %34 = vector.shape_cast %33 : vector<4x8x4xf32> to vector<32x4xf32>
    %c0_21 = arith.constant 0 : index
    %c0_22 = arith.constant 0 : index
    %35 = vector.load %arg8[%c0_21, %c0_22] : memref<4x128xf32, #tpu.memory_space<vmem>>, vector<4x128xf32>
    %cst_23 = arith.constant dense<0.000000e+00> : vector<32x128xf32>
    %36 = tpu.matmul %34, %35, %cst_23 {dimension_numbers = #tpu.dot_dimension_numbers<[1], [0], [0], [1], [0, 0, 1, 1], [], []>} : vector<32x4xf32>, vector<4x128xf32>, vector<32x128xf32> -> vector<32x128xf32>
    %37 = arith.mulf %36, %4 : vector<32x128xf32>
    %38 = vector.shape_cast %37 : vector<32x128xf32> to vector<4x8x128xf32>
    %cst_24 = arith.constant dense<0.000000e+00> : vector<4x128xf32>
    %39 = vector.multi_reduction <add>, %38, %cst_24 [1] : vector<4x8x128xf32> to vector<4x128xf32>
    %c0_25 = arith.constant 0 : index
    %c0_26 = arith.constant 0 : index
    %c0_27 = arith.constant 0 : index
    %40 = vector.load %arg9[%c0_25, %c0_26, %c0_27] : memref<1x4x128xf32, #tpu.memory_space<vmem>>, vector<1x4x128xf32>
    %41 = vector.shape_cast %40 : vector<1x4x128xf32> to vector<4x128xf32>
    %42 = vector.shape_cast %39 : vector<4x128xf32> to vector<1x4x128xf32>
    tpu.vector_store %arg9[%c0_25, %c0_26, %c0_27], %42 {strides = array<i32>} : memref<1x4x128xf32, #tpu.memory_space<vmem>>, vector<1x4x128xf32>,
    return
  }
  func.func @transform_0(%arg0: i32) -> (i32, i32, i32) {
    %c0_i32 = arith.constant 0 : i32
    %c0_i32_0 = arith.constant 0 : i32
    %c0_i32_1 = arith.constant 0 : i32
    return %arg0, %c0_i32, %c0_i32_0 : i32, i32, i32
  }
  func.func @transform_1(%arg0: i32) -> (i32, i32, i32) {
    %c0_i32 = arith.constant 0 : i32
    %c0_i32_0 = arith.constant 0 : i32
    %c0_i32_1 = arith.constant 0 : i32
    return %arg0, %c0_i32, %c0_i32_0 : i32, i32, i32
  }
  func.func @transform_2(%arg0: i32) -> (i32, i32) {
    %c0_i32 = arith.constant 0 : i32
    %c0_i32_0 = arith.constant 0 : i32
    %c0_i32_1 = arith.constant 0 : i32
    return %c0_i32, %c0_i32_0 : i32, i32
  }
  func.func @transform_3(%arg0: i32) -> (i32, i32) {
    %c0_i32 = arith.constant 0 : i32
    %c0_i32_0 = arith.constant 0 : i32
    %c0_i32_1 = arith.constant 0 : i32
    return %c0_i32, %c0_i32_0 : i32, i32
  }
  func.func @transform_4(%arg0: i32) -> (i32, i32) {
    %c0_i32 = arith.constant 0 : i32
    %c0_i32_0 = arith.constant 0 : i32
    %c0_i32_1 = arith.constant 0 : i32
    return %c0_i32, %c0_i32_0 : i32, i32
  }
  func.func @transform_5(%arg0: i32) -> (i32, i32) {
    %c0_i32 = arith.constant 0 : i32
    %c0_i32_0 = arith.constant 0 : i32
    %c0_i32_1 = arith.constant 0 : i32
    return %c0_i32, %c0_i32_0 : i32, i32
  }
  func.func @transform_6(%arg0: i32) -> (i32, i32) {
    %c0_i32 = arith.constant 0 : i32
    %c0_i32_0 = arith.constant 0 : i32
    %c0_i32_1 = arith.constant 0 : i32
    return %c0_i32, %c0_i32_0 : i32, i32
  }
  func.func @transform_7(%arg0: i32) -> (i32, i32) {
    %c0_i32 = arith.constant 0 : i32
    %c0_i32_0 = arith.constant 0 : i32
    %c0_i32_1 = arith.constant 0 : i32
    return %c0_i32, %c0_i32_0 : i32, i32
  }
  func.func @transform_8(%arg0: i32) -> (i32, i32, i32) {
    %c0_i32 = arith.constant 0 : i32
    %c0_i32_0 = arith.constant 0 : i32
    %c0_i32_1 = arith.constant 0 : i32
    return %arg0, %c0_i32, %c0_i32_0 : i32, i32, i32
  }
}

</mosaic_0001>

<llo_original>
// kernel: tpu_custom_call.1
$region0: #{tpu_custom_call.1}
  #allocation0 [shape = 'u32[]', space=smem, size = 0x4, offset = 0x4, fixed_abs, tag = 'smem constant byte address 0x4 - core index']
  #allocation1 [shape = 'u32[144,128]{1,0:T(1,128)}', space=vmem, size = 0x12000, scoped, tag = 'internal scratch']
  %s0 = inlined_call_operand.vmem [shape: f32[4,8,32], index: 0, kind: input, shape index: {}]
  %s1 = inlined_call_operand.vmem [shape: f32[4,8,32], index: 1, kind: input, shape index: {}]
  %s2 = inlined_call_operand.vmem [shape: f32[32,128], index: 2, kind: input, shape index: {}]
  %s3 = inlined_call_operand.vmem [shape: f32[32,4], index: 3, kind: input, shape index: {}]
  %s4 = inlined_call_operand.vmem [shape: f32[32,4], index: 4, kind: input, shape index: {}]
  %s5 = inlined_call_operand.vmem [shape: f32[1,4], index: 5, kind: input, shape index: {}]
  %s6 = inlined_call_operand.vmem [shape: f32[128,4], index: 6, kind: input, shape index: {}]
  %s7 = inlined_call_operand.vmem [shape: f32[4,128], index: 7, kind: input, shape index: {}]
  %s8 = inlined_call_operand.hbm [shape: f32[1,4,128], index: 8, kind: output, shape index: {}]
  %s9 = sld [smem:[#allocation0]]
  $region42: #{tpu_custom_call.1} parent=0
    _
  %s11 = ssub.s32 1, %s9
  %s12 = scalar_select 0, %s11, %s9
  $region1: #{tpu_custom_call.1} parent=0
    #allocation2 [shape = 'u8[2048]{0}', space=vmem, size = 0x800, scoped, tag = 'output window, operand 0, single buffered']
    #allocation3 [shape = 's32[1]{0}', space=sflag, size = 0x4, scoped, tag = 'scoped memory for tpu_custom_call.1']
    %13 = vsyncpa [#allocation3], 0
    // Predicated region
    $region2: #{tpu_custom_call.1} parent=1 // pred_check
      _
    $region3: #{tpu_custom_call.1} parent=1 // pred_check_branch
      %15 = sbr.rel (0) target = $region5
    $region4: #{tpu_custom_call.1} parent=1 // pred_region
      _
    $region5: #{tpu_custom_call.1} parent=1 // pred_fallthru
      _
    // Predicated region
    $region6: #{tpu_custom_call.1} parent=1 // pred_check
      _
    $region7: #{tpu_custom_call.1} parent=1 // pred_check_branch
      %17 = sbr.rel (0) target = $region9
    $region8: #{tpu_custom_call.1} parent=1 // pred_region
      _
    $region9: #{tpu_custom_call.1} parent=1 // pred_fallthru
      _
    // Predicated region
    $region10: #{tpu_custom_call.1} parent=1 // pred_check
      _
    $region11: #{tpu_custom_call.1} parent=1 // pred_check_branch
      %19 = sbr.rel (0) target = $region13
    $region12: #{tpu_custom_call.1} parent=1 // pred_region
      _
    $region13: #{tpu_custom_call.1} parent=1 // pred_fallthru
      _
    // Predicated region
    $region14: #{tpu_custom_call.1} parent=1 // pred_check
      _
    $region15: #{tpu_custom_call.1} parent=1 // pred_check_branch
      %21 = sbr.rel (0) target = $region17
    $region16: #{tpu_custom_call.1} parent=1 // pred_region
      _
    $region17: #{tpu_custom_call.1} parent=1 // pred_fallthru
      _
    // Predicated region
    $region18: #{tpu_custom_call.1} parent=1 // pred_check
      _
    $region19: #{tpu_custom_call.1} parent=1 // pred_check_branch
      %23 = sbr.rel (0) target = $region21
    $region20: #{tpu_custom_call.1} parent=1 // pred_region
      _
    $region21: #{tpu_custom_call.1} parent=1 // pred_fallthru
      _
    // Predicated region
    $region22: #{tpu_custom_call.1} parent=1 // pred_check
      _
    $region23: #{tpu_custom_call.1} parent=1 // pred_check_branch
      %25 = sbr.rel (0) target = $region25
    $region24: #{tpu_custom_call.1} parent=1 // pred_region
      _
    $region25: #{tpu_custom_call.1} parent=1 // pred_fallthru
      _
    // Predicated region
    $region26: #{tpu_custom_call.1} parent=1 // pred_check
      _
    $region27: #{tpu_custom_call.1} parent=1 // pred_check_branch
      %27 = sbr.rel (0) target = $region29
    $region28: #{tpu_custom_call.1} parent=1 // pred_region
      _
    $region29: #{tpu_custom_call.1} parent=1 // pred_fallthru
      _
    // Predicated region
    $region30: #{tpu_custom_call.1} parent=1 // pred_check
      _
    $region31: #{tpu_custom_call.1} parent=1 // pred_check_branch
      %29 = sbr.rel (0) target = $region33
    $region32: #{tpu_custom_call.1} parent=1 // pred_region
      _
    $region33: #{tpu_custom_call.1} parent=1 // pred_fallthru
      _
    %v30 = vld [vmem:[%s0] sm:$0xff]
    %v31 = vld [vmem:[%s0 + $0x8] sm:$0xff]
    %v32 = vld [vmem:[%s0 + $0x10] sm:$0xff]
    %v33 = vld [vmem:[%s0 + $0x18] sm:$0xff]
    %v34 = vld [vmem:[%s1] sm:$0xff]
    %v35 = vld [vmem:[%s1 + $0x8] sm:$0xff]
    %v36 = vld [vmem:[%s1 + $0x10] sm:$0xff]
    %v37 = vld [vmem:[%s1 + $0x18] sm:$0xff]
    %42 = vrot.lane.b32.xlu0 %v34, 32
    %v43 = vpop.permute.xlu0 %42
    %44 = vrot.lane.b32.xlu0 %v35, 32
    %v45 = vpop.permute.xlu0 %44
    %46 = vrot.lane.b32.xlu0 %v36, 32
    %v47 = vpop.permute.xlu0 %46
    %48 = vrot.lane.b32.xlu0 %v37, 32
    %v49 = vpop.permute.xlu0 %48
    %54 = vrot.lane.b32.xlu0 %v34, 64
    %v55 = vpop.permute.xlu0 %54
    %56 = vrot.lane.b32.xlu0 %v35, 64
    %v57 = vpop.permute.xlu0 %56
    %58 = vrot.lane.b32.xlu0 %v36, 64
    %v59 = vpop.permute.xlu0 %58
    %60 = vrot.lane.b32.xlu0 %v37, 64
    %v61 = vpop.permute.xlu0 %60
    %66 = vrot.lane.b32.xlu0 %v34, 96
    %v67 = vpop.permute.xlu0 %66
    %68 = vrot.lane.b32.xlu0 %v35, 96
    %v69 = vpop.permute.xlu0 %68
    %70 = vrot.lane.b32.xlu0 %v36, 96
    %v71 = vpop.permute.xlu0 %70
    %72 = vrot.lane.b32.xlu0 %v37, 96
    %v73 = vpop.permute.xlu0 %72
    %vm78 = vcmask 261120
    %v79 = vsel %vm78, %v34, %v43
    %v80 = vsel %vm78, %v35, %v45
    %v81 = vsel %vm78, %v36, %v47
    %v82 = vsel %vm78, %v37, %v49
    %vm83 = vcmask 523264
    %v84 = vsel %vm83, %v79, %v55
    %v85 = vsel %vm83, %v80, %v57
    %v86 = vsel %vm83, %v81, %v59
    %v87 = vsel %vm83, %v82, %v61
    %vm88 = vcmask 785408
    %v89 = vsel %vm88, %v84, %v67
    %v90 = vsel %vm88, %v85, %v69
    %v91 = vsel %vm88, %v86, %v71
    %v92 = vsel %vm88, %v87, %v73
    %v93 = vld [vmem:[%s2] sm:$0xff]
    %v94 = vld [vmem:[%s2 + $0x8] sm:$0xff]
    %v95 = vld [vmem:[%s2 + $0x10] sm:$0xff]
    %v96 = vld [vmem:[%s2 + $0x18] sm:$0xff]
    %v98 = vsel %vm78, %v30, 0
    %v101 = vsel %vm78, %v31, 0
    %v104 = vsel %vm78, %v32, 0
    %v107 = vsel %vm78, %v33, 0
    %109 = vmatprep.subr.mxu0 0.0
    %110 = vmatpush1.msra.mxu0 %v93
    %111 = vmatprep.subr.mxu0 0.0
    %112 = vmatpush1.msra.mxu0 %v94
    %113 = vmatprep.subr.mxu0 0.0
    %114 = vmatpush1.msra.mxu0 %v95
    %115 = vmatprep.subr.mxu0 0.0
    %116 = vmatpush1.msra.mxu0 %v96
    %117 = vmatprep.subr.mxu0 0.0
    %118 = vmatpush1.msra.mxu0 0.0
    %119 = vmatprep.subr.mxu0 0.0
    %120 = vmatpush1.msra.mxu0 0.0
    %121 = vmatprep.subr.mxu0 0.0
    %122 = vmatpush1.msra.mxu0 0.0
    %123 = vmatprep.subr.mxu0 0.0
    %124 = vmatpush1.msra.mxu0 0.0
    %125 = vmatprep.subr.mxu0 0.0
    %126 = vmatpush1.msra.mxu0 0.0
    %127 = vmatprep.subr.mxu0 0.0
    %128 = vmatpush1.msra.mxu0 0.0
    %129 = vmatprep.subr.mxu0 0.0
    %130 = vmatpush1.msra.mxu0 0.0
    %131 = vmatprep.subr.mxu0 0.0
    %132 = vmatpush1.msra.mxu0 0.0
    %133 = vmatprep.subr.mxu0 0.0
    %134 = vmatpush1.msra.mxu0 0.0
    %135 = vmatprep.subr.mxu0 0.0
    %136 = vmatpush1.msra.mxu0 0.0
    %137 = vmatprep.subr.mxu0 0.0
    %138 = vmatpush1.msra.mxu0 0.0
    %139 = vmatprep.subr.mxu0 0.0
    %140 = vmatpush1.msra.mxu0 0.0
    %141 = vmatprep.subr.mxu0 0.0
    %142 = vmatpush1.msra.mxu0 0.0
    %143 = vmatprep.subr.mxu0 0.0
    %144 = vmatpush1.msra.mxu0 0.0
    %145 = vmatprep.subr.mxu0 0.0
    %146 = vmatpush1.msra.mxu0 0.0
    %147 = vmatprep.subr.mxu0 0.0
    %148 = vmatpush1.msra.mxu0 0.0
    %149 = vmatprep.subr.mxu0 0.0
    %150 = vmatpush1.msra.mxu0 0.0
    %151 = vmatprep.subr.mxu0 0.0
    %152 = vmatpush1.msra.mxu0 0.0
    %153 = vmatprep.subr.mxu0 0.0
    %154 = vmatpush1.msra.mxu0 0.0
    %155 = vmatprep.subr.mxu0 0.0
    %156 = vmatpush1.msra.mxu0 0.0
    %157 = vmatprep.subr.mxu0 0.0
    %158 = vmatpush1.msra.mxu0 0.0
    %159 = vmatprep.subr.mxu0 0.0
    %160 = vmatpush1.msra.mxu0 0.0
    %161 = vmatprep.subr.mxu0 0.0
    %162 = vmatpush1.msra.mxu0 0.0
    %163 = vmatprep.subr.mxu0 0.0
    %164 = vmatpush1.msra.mxu0 0.0
    %165 = vmatprep.subr.mxu0 0.0
    %166 = vmatpush1.msra.mxu0 0.0
    %167 = vmatprep.subr.mxu0 0.0
    %168 = vmatpush1.msra.mxu0 0.0
    %169 = vmatprep.subr.mxu0 0.0
    %170 = vmatpush1.msra.mxu0 0.0
    %171 = vmatprep.subr.mxu0 0.0
    %172 = vmatpush1.msra.mxu0 0.0
    %173 = vmatprep.mubr.f32.mxu0 0.0
    %174 = vmatmul.mubr.f32.gmra.mrb[0].mxu0 %v98
    %v175 = vpop.f32.mrb[0].mxu0
    %v176 = vadd.f32 0.0, %v175
    %v177 = vpop.f32.mrb[0].mxu0
    %178 = vmatprep.mubr.f32.mxu0 0.0
    %179 = vmatmul.mubr.f32.gmra.mrb[0].mxu0 %v101
    %v180 = vpop.f32.mrb[0].mxu0
    %v181 = vadd.f32 0.0, %v180
    %v182 = vpop.f32.mrb[0].mxu0
    %183 = vmatprep.mubr.f32.mxu0 0.0
    %184 = vmatmul.mubr.f32.gmra.mrb[0].mxu0 %v104
    %v185 = vpop.f32.mrb[0].mxu0
    %v186 = vadd.f32 0.0, %v185
    %v187 = vpop.f32.mrb[0].mxu0
    %188 = vmatprep.mubr.f32.mxu0 0.0
    %189 = vmatmul.mubr.f32.gmra.mrb[0].mxu0 %v107
    %v190 = vpop.f32.mrb[0].mxu0
    %v191 = vadd.f32 0.0, %v190
    %v192 = vpop.f32.mrb[0].mxu0
    %193 = vdwg.mxu0
    %v194 = vld [vmem:[%s3] sm:$0xff]
    %v195 = vld [vmem:[%s3 + $0x8] sm:$0xff]
    %v196 = vld [vmem:[%s3 + $0x10] sm:$0xff]
    %v197 = vld [vmem:[%s3 + $0x18] sm:$0xff]
    %v198 = vld [vmem:[%s4] sm:$0xff]
    %v199 = vld [vmem:[%s4 + $0x8] sm:$0xff]
    %v200 = vld [vmem:[%s4 + $0x10] sm:$0xff]
    %v201 = vld [vmem:[%s4 + $0x18] sm:$0xff]
    %v202 = vsel %vm78, %v34, 0
    %v204 = vsel %vm78, %v35, 0
    %v206 = vsel %vm78, %v36, 0
    %v208 = vsel %vm78, %v37, 0
    %210 = vmatprep.subr.mxu0 0.0
    %211 = vmatpush1.msra.mxu0 %v198
    %212 = vmatprep.subr.mxu0 0.0
    %213 = vmatpush1.msra.mxu0 %v199
    %214 = vmatprep.subr.mxu0 0.0
    %215 = vmatpush1.msra.mxu0 %v200
    %216 = vmatprep.subr.mxu0 0.0
    %217 = vmatpush1.msra.mxu0 %v201
    %218 = vmatprep.subr.mxu0 0.0
    %219 = vmatpush1.msra.mxu0 0.0
    %220 = vmatprep.subr.mxu0 0.0
    %221 = vmatpush1.msra.mxu0 0.0
    %222 = vmatprep.subr.mxu0 0.0
    %223 = vmatpush1.msra.mxu0 0.0
    %224 = vmatprep.subr.mxu0 0.0
    %225 = vmatpush1.msra.mxu0 0.0
    %226 = vmatprep.subr.mxu0 0.0
    %227 = vmatpush1.msra.mxu0 0.0
    %228 = vmatprep.subr.mxu0 0.0
    %229 = vmatpush1.msra.mxu0 0.0
    %230 = vmatprep.subr.mxu0 0.0
    %231 = vmatpush1.msra.mxu0 0.0
    %232 = vmatprep.subr.mxu0 0.0
    %233 = vmatpush1.msra.mxu0 0.0
    %234 = vmatprep.subr.mxu0 0.0
    %235 = vmatpush1.msra.mxu0 0.0
    %236 = vmatprep.subr.mxu0 0.0
    %237 = vmatpush1.msra.mxu0 0.0
    %238 = vmatprep.subr.mxu0 0.0
    %239 = vmatpush1.msra.mxu0 0.0
    %240 = vmatprep.subr.mxu0 0.0
    %241 = vmatpush1.msra.mxu0 0.0
    %242 = vmatprep.subr.mxu0 0.0
    %243 = vmatpush1.msra.mxu0 0.0
    %244 = vmatprep.subr.mxu0 0.0
    %245 = vmatpush1.msra.mxu0 0.0
    %246 = vmatprep.subr.mxu0 0.0
    %247 = vmatpush1.msra.mxu0 0.0
    %248 = vmatprep.subr.mxu0 0.0
    %249 = vmatpush1.msra.mxu0 0.0
    %250 = vmatprep.subr.mxu0 0.0
    %251 = vmatpush1.msra.mxu0 0.0
    %252 = vmatprep.subr.mxu0 0.0
    %253 = vmatpush1.msra.mxu0 0.0
    %254 = vmatprep.subr.mxu0 0.0
    %255 = vmatpush1.msra.mxu0 0.0
    %256 = vmatprep.subr.mxu0 0.0
    %257 = vmatpush1.msra.mxu0 0.0
    %258 = vmatprep.subr.mxu0 0.0
    %259 = vmatpush1.msra.mxu0 0.0
    %260 = vmatprep.subr.mxu0 0.0
    %261 = vmatpush1.msra.mxu0 0.0
    %262 = vmatprep.subr.mxu0 0.0
    %263 = vmatpush1.msra.mxu0 0.0
    %264 = vmatprep.subr.mxu0 0.0
    %265 = vmatpush1.msra.mxu0 0.0
    %266 = vmatprep.subr.mxu0 0.0
    %267 = vmatpush1.msra.mxu0 0.0
    %268 = vmatprep.subr.mxu0 0.0
    %269 = vmatpush1.msra.mxu0 0.0
    %270 = vmatprep.subr.mxu0 0.0
    %271 = vmatpush1.msra.mxu0 0.0
    %272 = vmatprep.subr.mxu0 0.0
    %273 = vmatpush1.msra.mxu0 0.0
    %274 = vmatprep.mubr.f32.mxu0 0.0
    %275 = vmatmul.mubr.f32.gmra.mrb[0].mxu0 %v202
    %v276 = vpop.f32.mrb[0].mxu0
    %v277 = vadd.f32 0.0, %v276
    %v278 = vpop.f32.mrb[0].mxu0
    %279 = vmatprep.mubr.f32.mxu0 0.0
    %280 = vmatmul.mubr.f32.gmra.mrb[0].mxu0 %v204
    %v281 = vpop.f32.mrb[0].mxu0
    %v282 = vadd.f32 0.0, %v281
    %v283 = vpop.f32.mrb[0].mxu0
    %284 = vmatprep.mubr.f32.mxu0 0.0
    %285 = vmatmul.mubr.f32.gmra.mrb[0].mxu0 %v206
    %v286 = vpop.f32.mrb[0].mxu0
    %v287 = vadd.f32 0.0, %v286
    %v288 = vpop.f32.mrb[0].mxu0
    %289 = vmatprep.mubr.f32.mxu0 0.0
    %290 = vmatmul.mubr.f32.gmra.mrb[0].mxu0 %v208
    %v291 = vpop.f32.mrb[0].mxu0
    %v292 = vadd.f32 0.0, %v291
    %v293 = vpop.f32.mrb[0].mxu0
    %294 = vdwg.mxu0
    %295 = vmatprep.subr.mxu0 0.0
    %296 = vmatpush1.msra.mxu0 %v194
    %297 = vmatprep.subr.mxu0 0.0
    %298 = vmatpush1.msra.mxu0 %v195
    %299 = vmatprep.subr.mxu0 0.0
    %300 = vmatpush1.msra.mxu0 %v196
    %301 = vmatprep.subr.mxu0 0.0
    %302 = vmatpush1.msra.mxu0 %v197
    %303 = vmatprep.subr.mxu0 0.0
    %304 = vmatpush1.msra.mxu0 0.0
    %305 = vmatprep.subr.mxu0 0.0
    %306 = vmatpush1.msra.mxu0 0.0
    %307 = vmatprep.subr.mxu0 0.0
    %308 = vmatpush1.msra.mxu0 0.0
    %309 = vmatprep.subr.mxu0 0.0
    %310 = vmatpush1.msra.mxu0 0.0
    %311 = vmatprep.subr.mxu0 0.0
    %312 = vmatpush1.msra.mxu0 0.0
    %313 = vmatprep.subr.mxu0 0.0
    %314 = vmatpush1.msra.mxu0 0.0
    %315 = vmatprep.subr.mxu0 0.0
    %316 = vmatpush1.msra.mxu0 0.0
    %317 = vmatprep.subr.mxu0 0.0
    %318 = vmatpush1.msra.mxu0 0.0
    %319 = vmatprep.subr.mxu0 0.0
    %320 = vmatpush1.msra.mxu0 0.0
    %321 = vmatprep.subr.mxu0 0.0
    %322 = vmatpush1.msra.mxu0 0.0
    %323 = vmatprep.subr.mxu0 0.0
    %324 = vmatpush1.msra.mxu0 0.0
    %325 = vmatprep.subr.mxu0 0.0
    %326 = vmatpush1.msra.mxu0 0.0
    %327 = vmatprep.subr.mxu0 0.0
    %328 = vmatpush1.msra.mxu0 0.0
    %329 = vmatprep.subr.mxu0 0.0
    %330 = vmatpush1.msra.mxu0 0.0
    %331 = vmatprep.subr.mxu0 0.0
    %332 = vmatpush1.msra.mxu0 0.0
    %333 = vmatprep.subr.mxu0 0.0
    %334 = vmatpush1.msra.mxu0 0.0
    %335 = vmatprep.subr.mxu0 0.0
    %336 = vmatpush1.msra.mxu0 0.0
    %337 = vmatprep.subr.mxu0 0.0
    %338 = vmatpush1.msra.mxu0 0.0
    %339 = vmatprep.subr.mxu0 0.0
    %340 = vmatpush1.msra.mxu0 0.0
    %341 = vmatprep.subr.mxu0 0.0
    %342 = vmatpush1.msra.mxu0 0.0
    %343 = vmatprep.subr.mxu0 0.0
    %344 = vmatpush1.msra.mxu0 0.0
    %345 = vmatprep.subr.mxu0 0.0
    %346 = vmatpush1.msra.mxu0 0.0
    %347 = vmatprep.subr.mxu0 0.0
    %348 = vmatpush1.msra.mxu0 0.0
    %349 = vmatprep.subr.mxu0 0.0
    %350 = vmatpush1.msra.mxu0 0.0
    %351 = vmatprep.subr.mxu0 0.0
    %352 = vmatpush1.msra.mxu0 0.0
    %353 = vmatprep.subr.mxu0 0.0
    %354 = vmatpush1.msra.mxu0 0.0
    %355 = vmatprep.subr.mxu0 0.0
    %356 = vmatpush1.msra.mxu0 0.0
    %357 = vmatprep.subr.mxu0 0.0
    %358 = vmatpush1.msra.mxu0 0.0
    %359 = vmatprep.mubr.f32.mxu0 0.0
    %360 = vmatmul.mubr.f32.gmra.mrb[0].mxu0 %v98
    %v361 = vpop.f32.mrb[0].mxu0
    %v362 = vadd.f32 %v277, %v361
    %v363 = vpop.f32.mrb[0].mxu0
    %364 = vmatprep.mubr.f32.mxu0 0.0
    %365 = vmatmul.mubr.f32.gmra.mrb[0].mxu0 %v101
    %v366 = vpop.f32.mrb[0].mxu0
    %v367 = vadd.f32 %v282, %v366
    %v368 = vpop.f32.mrb[0].mxu0
    %369 = vmatprep.mubr.f32.mxu0 0.0
    %370 = vmatmul.mubr.f32.gmra.mrb[0].mxu0 %v104
    %v371 = vpop.f32.mrb[0].mxu0
    %v372 = vadd.f32 %v287, %v371
    %v373 = vpop.f32.mrb[0].mxu0
    %374 = vmatprep.mubr.f32.mxu0 0.0
    %375 = vmatmul.mubr.f32.gmra.mrb[0].mxu0 %v107
    %v376 = vpop.f32.mrb[0].mxu0
    %v377 = vadd.f32 %v292, %v376
    %v378 = vpop.f32.mrb[0].mxu0
    %379 = vdwg.mxu0
    %v380 = vmul.f32 %v176, %v89
    %v381 = vmul.f32 %v181, %v90
    %v382 = vmul.f32 %v186, %v91
    %v383 = vmul.f32 %v191, %v92
    %v384 = vld [vmem:[%s6] sm:$0xff]
    %v385 = vld [vmem:[%s6 + $0x8] sm:$0xff]
    %v386 = vld [vmem:[%s6 + $0x10] sm:$0xff]
    %v387 = vld [vmem:[%s6 + $0x18] sm:$0xff]
    %v388 = vld [vmem:[%s6 + $0x20] sm:$0xff]
    %v389 = vld [vmem:[%s6 + $0x28] sm:$0xff]
    %v390 = vld [vmem:[%s6 + $0x30] sm:$0xff]
    %v391 = vld [vmem:[%s6 + $0x38] sm:$0xff]
    %v392 = vld [vmem:[%s6 + $0x40] sm:$0xff]
    %v393 = vld [vmem:[%s6 + $0x48] sm:$0xff]
    %v394 = vld [vmem:[%s6 + $0x50] sm:$0xff]
    %v395 = vld [vmem:[%s6 + $0x58] sm:$0xff]
    %v396 = vld [vmem:[%s6 + $0x60] sm:$0xff]
    %v397 = vld [vmem:[%s6 + $0x68] sm:$0xff]
    %v398 = vld [vmem:[%s6 + $0x70] sm:$0xff]
    %v399 = vld [vmem:[%s6 + $0x78] sm:$0xff]
    %400 = vmatprep.subr.mxu0 0.0
    %401 = vmatpush1.msra.mxu0 %v384
    %402 = vmatprep.subr.mxu0 0.0
    %403 = vmatpush1.msra.mxu0 %v385
    %404 = vmatprep.subr.mxu0 0.0
    %405 = vmatpush1.msra.mxu0 %v386
    %406 = vmatprep.subr.mxu0 0.0
    %407 = vmatpush1.msra.mxu0 %v387
    %408 = vmatprep.subr.mxu0 0.0
    %409 = vmatpush1.msra.mxu0 %v388
    %410 = vmatprep.subr.mxu0 0.0
    %411 = vmatpush1.msra.mxu0 %v389
    %412 = vmatprep.subr.mxu0 0.0
    %413 = vmatpush1.msra.mxu0 %v390
    %414 = vmatprep.subr.mxu0 0.0
    %415 = vmatpush1.msra.mxu0 %v391
    %416 = vmatprep.subr.mxu0 0.0
    %417 = vmatpush1.msra.mxu0 %v392
    %418 = vmatprep.subr.mxu0 0.0
    %419 = vmatpush1.msra.mxu0 %v393
    %420 = vmatprep.subr.mxu0 0.0
    %421 = vmatpush1.msra.mxu0 %v394
    %422 = vmatprep.subr.mxu0 0.0
    %423 = vmatpush1.msra.mxu0 %v395
    %424 = vmatprep.subr.mxu0 0.0
    %425 = vmatpush1.msra.mxu0 %v396
    %426 = vmatprep.subr.mxu0 0.0
    %427 = vmatpush1.msra.mxu0 %v397
    %428 = vmatprep.subr.mxu0 0.0
    %429 = vmatpush1.msra.mxu0 %v398
    %430 = vmatprep.subr.mxu0 0.0
    %431 = vmatpush1.msra.mxu0 %v399
    %432 = vmatprep.subr.mxu0 0.0
    %433 = vmatpush1.msra.mxu0 0.0
    %434 = vmatprep.subr.mxu0 0.0
    %435 = vmatpush1.msra.mxu0 0.0
    %436 = vmatprep.subr.mxu0 0.0
    %437 = vmatpush1.msra.mxu0 0.0
    %438 = vmatprep.subr.mxu0 0.0
    %439 = vmatpush1.msra.mxu0 0.0
    %440 = vmatprep.subr.mxu0 0.0
    %441 = vmatpush1.msra.mxu0 0.0
    %442 = vmatprep.subr.mxu0 0.0
    %443 = vmatpush1.msra.mxu0 0.0
    %444 = vmatprep.subr.mxu0 0.0
    %445 = vmatpush1.msra.mxu0 0.0
    %446 = vmatprep.subr.mxu0 0.0
    %447 = vmatpush1.msra.mxu0 0.0
    %448 = vmatprep.subr.mxu0 0.0
    %449 = vmatpush1.msra.mxu0 0.0
    %450 = vmatprep.subr.mxu0 0.0
    %451 = vmatpush1.msra.mxu0 0.0
    %452 = vmatprep.subr.mxu0 0.0
    %453 = vmatpush1.msra.mxu0 0.0
    %454 = vmatprep.subr.mxu0 0.0
    %455 = vmatpush1.msra.mxu0 0.0
    %456 = vmatprep.subr.mxu0 0.0
    %457 = vmatpush1.msra.mxu0 0.0
    %458 = vmatprep.subr.mxu0 0.0
    %459 = vmatpush1.msra.mxu0 0.0
    %460 = vmatprep.subr.mxu0 0.0
    %461 = vmatpush1.msra.mxu0 0.0
    %462 = vmatprep.subr.mxu0 0.0
    %463 = vmatpush1.msra.mxu0 0.0
    %464 = vmatprep.mubr.f32.mxu0 0.0
    %465 = vmatmul.mubr.f32.gmra.mrb[0].mxu0 %v380
    %v466 = vpop.f32.mrb[0].mxu0
    %v467 = vadd.f32 %v362, %v466
    %v468 = vpop.f32.mrb[0].mxu0
    %469 = vmatprep.mubr.f32.mxu0 0.0
    %470 = vmatmul.mubr.f32.gmra.mrb[0].mxu0 %v381
    %v471 = vpop.f32.mrb[0].mxu0
    %v472 = vadd.f32 %v367, %v471
    %v473 = vpop.f32.mrb[0].mxu0
    %474 = vmatprep.mubr.f32.mxu0 0.0
    %475 = vmatmul.mubr.f32.gmra.mrb[0].mxu0 %v382
    %v476 = vpop.f32.mrb[0].mxu0
    %v477 = vadd.f32 %v372, %v476
    %v478 = vpop.f32.mrb[0].mxu0
    %479 = vmatprep.mubr.f32.mxu0 0.0
    %480 = vmatmul.mubr.f32.gmra.mrb[0].mxu0 %v383
    %v481 = vpop.f32.mrb[0].mxu0
    %v482 = vadd.f32 %v377, %v481
    %v483 = vpop.f32.mrb[0].mxu0
    %484 = vdwg.mxu0
    %v485 = vld [vmem:[%s5] sm:$0x1]
    %v487 = vlaneseq
    %v488 = vshrl.u32 %v487, 7
    %v489 = vsub.s32 0, %v488
    %v490 = vrot.slane %v485, %v489
    %v492 = vadd.f32 %v467, %v490
    %v493 = vadd.f32 %v472, %v490
    %v494 = vadd.f32 %v477, %v490
    %v495 = vadd.f32 %v482, %v490
    %vm496 = vcmask 31744
    %v497 = vsel %vm496, %v492, -inf
    %v498 = vrot.slane %v497, 4
    %v499 = vmax.f32 %v497, %v498
    %v500 = vrot.slane %v499, 2
    %v501 = vmax.f32 %v499, %v500
    %v502 = vrot.slane %v501, 1
    %v503 = vmax.f32 %v501, %v502
    %v504 = vsel %vm496, %v493, -inf
    %v505 = vrot.slane %v504, 4
    %v506 = vmax.f32 %v504, %v505
    %v507 = vrot.slane %v506, 2
    %v508 = vmax.f32 %v506, %v507
    %v509 = vrot.slane %v508, 1
    %v510 = vmax.f32 %v508, %v509
    %v511 = vsel %vm496, %v494, -inf
    %v512 = vrot.slane %v511, 4
    %v513 = vmax.f32 %v511, %v512
    %v514 = vrot.slane %v513, 2
    %v515 = vmax.f32 %v513, %v514
    %v516 = vrot.slane %v515, 1
    %v517 = vmax.f32 %v515, %v516
    %v518 = vsel %vm496, %v495, -inf
    %v519 = vrot.slane %v518, 4
    %v520 = vmax.f32 %v518, %v519
    %v521 = vrot.slane %v520, 2
    %v522 = vmax.f32 %v520, %v521
    %v523 = vrot.slane %v522, 1
    %v524 = vmax.f32 %v522, %v523
    %v525 = vsub.f32 %v492, %v503
    %v526 = vsub.f32 %v493, %v510
    %v527 = vsub.f32 %v494, %v517
    %v528 = vsub.f32 %v495, %v524
    %v529 = vmul.f32 %v525, 1.442695
    %v530 = vpow.pop %v529
    %v531 = vmul.f32 %v526, 1.442695
    %v532 = vpow.pop %v531
    %v533 = vmul.f32 %v527, 1.442695
    %v534 = vpow.pop %v533
    %v535 = vmul.f32 %v528, 1.442695
    %v536 = vpow.pop %v535
    %v537 = vsel %vm496, %v530, 0.0
    %v538 = vrot.slane %v537, 4
    %v539 = vadd.f32 %v537, %v538
    %v540 = vrot.slane %v539, 2
    %v541 = vadd.f32 %v539, %v540
    %v542 = vrot.slane %v541, 1
    %v543 = vadd.f32 %v541, %v542
    %v544 = vsel %vm496, %v532, 0.0
    %v545 = vrot.slane %v544, 4
    %v546 = vadd.f32 %v544, %v545
    %v547 = vrot.slane %v546, 2
    %v548 = vadd.f32 %v546, %v547
    %v549 = vrot.slane %v548, 1
    %v550 = vadd.f32 %v548, %v549
    %v551 = vsel %vm496, %v534, 0.0
    %v552 = vrot.slane %v551, 4
    %v553 = vadd.f32 %v551, %v552
    %v554 = vrot.slane %v553, 2
    %v555 = vadd.f32 %v553, %v554
    %v556 = vrot.slane %v555, 1
    %v557 = vadd.f32 %v555, %v556
    %v558 = vsel %vm496, %v536, 0.0
    %v559 = vrot.slane %v558, 4
    %v560 = vadd.f32 %v558, %v559
    %v561 = vrot.slane %v560, 2
    %v562 = vadd.f32 %v560, %v561
    %v563 = vrot.slane %v562, 1
    %v564 = vadd.f32 %v562, %v563
    %v565 = vrcp.pop %v543
    %v566 = vrcp.pop %v550
    %v567 = vrcp.pop %v557
    %v568 = vrcp.pop %v564
    %v569 = vmul.f32 %v543, %v565
    %v570 = vmul.f32 %v550, %v566
    %v571 = vmul.f32 %v557, %v567
    %v572 = vmul.f32 %v564, %v568
    %v573 = vsub.f32 2.0, %v569
    %v574 = vsub.f32 2.0, %v570
    %v575 = vsub.f32 2.0, %v571
    %v576 = vsub.f32 2.0, %v572
    %v577 = vmul.f32 %v565, %v573
    %v578 = vmul.f32 %v566, %v574
    %v579 = vmul.f32 %v567, %v575
    %v580 = vmul.f32 %v568, %v576
    %v581 = vmul.f32 %v530, %v577
    %v582 = vmul.f32 %v532, %v578
    %v583 = vmul.f32 %v534, %v579
    %v584 = vmul.f32 %v536, %v580
    %v585 = vld [vmem:[%s7] sm:$0xf]
    %v587 = vsel %vm496, %v581, 0
    %v590 = vsel %vm496, %v582, 0
    %v593 = vsel %vm496, %v583, 0
    %v596 = vsel %vm496, %v584, 0
    %vm598 = vcmask 1043456
    %v600 = vsel %vm598, %v585, 0
    %602 = vmatprep.subr.mxu0 0.0
    %603 = vmatpush1.msra.mxu0 %v600
    %604 = vmatprep.subr.mxu0 0.0
    %605 = vmatpush1.msra.mxu0 0.0
    %606 = vmatprep.subr.mxu0 0.0
    %607 = vmatpush1.msra.mxu0 0.0
    %608 = vmatprep.subr.mxu0 0.0
    %609 = vmatpush1.msra.mxu0 0.0
    %610 = vmatprep.subr.mxu0 0.0
    %611 = vmatpush1.msra.mxu0 0.0
    %612 = vmatprep.subr.mxu0 0.0
    %613 = vmatpush1.msra.mxu0 0.0
    %614 = vmatprep.subr.mxu0 0.0
    %615 = vmatpush1.msra.mxu0 0.0
    %616 = vmatprep.subr.mxu0 0.0
    %617 = vmatpush1.msra.mxu0 0.0
    %618 = vmatprep.subr.mxu0 0.0
    %619 = vmatpush1.msra.mxu0 0.0
    %620 = vmatprep.subr.mxu0 0.0
    %621 = vmatpush1.msra.mxu0 0.0
    %622 = vmatprep.subr.mxu0 0.0
    %623 = vmatpush1.msra.mxu0 0.0
    %624 = vmatprep.subr.mxu0 0.0
    %625 = vmatpush1.msra.mxu0 0.0
    %626 = vmatprep.subr.mxu0 0.0
    %627 = vmatpush1.msra.mxu0 0.0
    %628 = vmatprep.subr.mxu0 0.0
    %629 = vmatpush1.msra.mxu0 0.0
    %630 = vmatprep.subr.mxu0 0.0
    %631 = vmatpush1.msra.mxu0 0.0
    %632 = vmatprep.subr.mxu0 0.0
    %633 = vmatpush1.msra.mxu0 0.0
    %634 = vmatprep.subr.mxu0 0.0
    %635 = vmatpush1.msra.mxu0 0.0
    %636 = vmatprep.subr.mxu0 0.0
    %637 = vmatpush1.msra.mxu0 0.0
    %638 = vmatprep.subr.mxu0 0.0
    %639 = vmatpush1.msra.mxu0 0.0
    %640 = vmatprep.subr.mxu0 0.0
    %641 = vmatpush1.msra.mxu0 0.0
    %642 = vmatprep.subr.mxu0 0.0
    %643 = vmatpush1.msra.mxu0 0.0
    %644 = vmatprep.subr.mxu0 0.0
    %645 = vmatpush1.msra.mxu0 0.0
    %646 = vmatprep.subr.mxu0 0.0
    %647 = vmatpush1.msra.mxu0 0.0
    %648 = vmatprep.subr.mxu0 0.0
    %649 = vmatpush1.msra.mxu0 0.0
    %650 = vmatprep.subr.mxu0 0.0
    %651 = vmatpush1.msra.mxu0 0.0
    %652 = vmatprep.subr.mxu0 0.0
    %653 = vmatpush1.msra.mxu0 0.0
    %654 = vmatprep.subr.mxu0 0.0
    %655 = vmatpush1.msra.mxu0 0.0
    %656 = vmatprep.subr.mxu0 0.0
    %657 = vmatpush1.msra.mxu0 0.0
    %658 = vmatprep.subr.mxu0 0.0
    %659 = vmatpush1.msra.mxu0 0.0
    %660 = vmatprep.subr.mxu0 0.0
    %661 = vmatpush1.msra.mxu0 0.0
    %662 = vmatprep.subr.mxu0 0.0
    %663 = vmatpush1.msra.mxu0 0.0
    %664 = vmatprep.subr.mxu0 0.0
    %665 = vmatpush1.msra.mxu0 0.0
    %666 = vmatprep.mubr.f32.mxu0 0.0
    %667 = vmatmul.mubr.f32.gmra.mrb[0].mxu0 %v587
    %v668 = vpop.f32.mrb[0].mxu0
    %v669 = vadd.f32 0.0, %v668
    %v670 = vpop.f32.mrb[0].mxu0
    %671 = vmatprep.mubr.f32.mxu0 0.0
    %672 = vmatmul.mubr.f32.gmra.mrb[0].mxu0 %v590
    %v673 = vpop.f32.mrb[0].mxu0
    %v674 = vadd.f32 0.0, %v673
    %v675 = vpop.f32.mrb[0].mxu0
    %676 = vmatprep.mubr.f32.mxu0 0.0
    %677 = vmatmul.mubr.f32.gmra.mrb[0].mxu0 %v593
    %v678 = vpop.f32.mrb[0].mxu0
    %v679 = vadd.f32 0.0, %v678
    %v680 = vpop.f32.mrb[0].mxu0
    %681 = vmatprep.mubr.f32.mxu0 0.0
    %682 = vmatmul.mubr.f32.gmra.mrb[0].mxu0 %v596
    %v683 = vpop.f32.mrb[0].mxu0
    %v684 = vadd.f32 0.0, %v683
    %v685 = vpop.f32.mrb[0].mxu0
    %686 = vdwg.mxu0
    %v687 = vmul.f32 %v669, %v89
    %v688 = vmul.f32 %v674, %v90
    %v689 = vmul.f32 %v679, %v91
    %v690 = vmul.f32 %v684, %v92
    %v691 = vrot.slane %v687, 4
    %v692 = vadd.f32 %v687, %v691
    %v693 = vrot.slane %v692, 2
    %v694 = vadd.f32 %v692, %v693
    %v695 = vrot.slane %v694, 1
    %v696 = vadd.f32 %v694, %v695
    %v697 = vrot.slane %v688, 4
    %v698 = vadd.f32 %v688, %v697
    %v699 = vrot.slane %v698, 2
    %v700 = vadd.f32 %v698, %v699
    %v701 = vrot.slane %v700, 1
    %v702 = vadd.f32 %v700, %v701
    %v703 = vrot.slane %v689, 4
    %v704 = vadd.f32 %v689, %v703
    %v705 = vrot.slane %v704, 2
    %v706 = vadd.f32 %v704, %v705
    %v707 = vrot.slane %v706, 1
    %v708 = vadd.f32 %v706, %v707
    %v709 = vrot.slane %v690, 4
    %v710 = vadd.f32 %v690, %v709
    %v711 = vrot.slane %v710, 2
    %v712 = vadd.f32 %v710, %v711
    %v713 = vrot.slane %v712, 1
    %v714 = vadd.f32 %v712, %v713
    %vm719 = vcmask 1041409
    %v720 = vsel %vm719, %v702, %v696
    %vm721 = vcmask 1042434
    %v722 = vsel %vm721, %v708, %v720
    %vm723 = vcmask 1043459
    %v724 = vsel %vm723, %v714, %v722
    %726 = vst [vmem:[#allocation2] sm:$0xf] %v724
    // Predicated region
    $region34: #{tpu_custom_call.1} parent=1 // pred_check
      _
    $region35: #{tpu_custom_call.1} parent=1 // pred_check_branch
      %728 = sbr.rel (0) target = $region37
    $region36: #{tpu_custom_call.1} parent=1 // pred_region
      %s730 = ssub.s32 64, 64
      %731 = vsyncadd [#allocation3], %s730
      %s733 = sshll.u32 [#allocation2], 4
      %s734 = int_to_ptr.vmem [resolvable:$true] %s733
      %736 = dma.vmem_to_hbm [thread:$0]  %s734, 64, %s8, [#allocation3]
    $region37: #{tpu_custom_call.1} parent=1 // pred_fallthru
      _
    // Predicated region
    $region38: #{tpu_custom_call.1} parent=1 // pred_check
      _
    $region39: #{tpu_custom_call.1} parent=1 // pred_check_branch
      %738 = sbr.rel (0) target = $region41
    $region40: #{tpu_custom_call.1} parent=1 // pred_region
      %739 = dma.done [#allocation3], 64
    $region41: #{tpu_custom_call.1} parent=1 // pred_fallthru
      _
    %740 = vsyncpa [#allocation3], 1

// kernel: tpu_custom_call.1
$region0: #{tpu_custom_call.1}
  #allocation0 [shape = 'u32[]', space=smem, size = 0x4, offset = 0x4, fixed_abs, tag = 'smem constant byte address 0x4 - core index']
  #allocation1 [shape = 'u32[144,128]{1,0:T(1,128)}', space=vmem, size = 0x12000, scoped, tag = 'internal scratch']
  %s0 = inlined_call_operand.vmem [shape: f32[4,8,32], index: 0, kind: input, shape index: {}]
  %s1 = inlined_call_operand.vmem [shape: f32[4,8,32], index: 1, kind: input, shape index: {}]
  %s2 = inlined_call_operand.vmem [shape: f32[32,128], index: 2, kind: input, shape index: {}]
  %s3 = inlined_call_operand.vmem [shape: f32[32,4], index: 3, kind: input, shape index: {}]
  %s4 = inlined_call_operand.vmem [shape: f32[32,4], index: 4, kind: input, shape index: {}]
  %s5 = inlined_call_operand.vmem [shape: f32[1,4], index: 5, kind: input, shape index: {}]
  %s6 = inlined_call_operand.vmem [shape: f32[128,4], index: 6, kind: input, shape index: {}]
  %s7 = inlined_call_operand.vmem [shape: f32[4,128], index: 7, kind: input, shape index: {}]
  %s8 = inlined_call_operand.hbm [shape: f32[1,4,128], index: 8, kind: output, shape index: {}]
  %s9 = sld [smem:[#allocation0]]
  $region42: #{tpu_custom_call.1} parent=0
    _
  %s11 = ssub.s32 1, %s9
  %s12 = scalar_select 0, %s11, %s9
  $region1: #{tpu_custom_call.1} parent=0
    #allocation2 [shape = 'u8[2048]{0}', space=vmem, size = 0x800, scoped, tag = 'output window, operand 0, single buffered']
    #allocation3 [shape = 's32[1]{0}', space=sflag, size = 0x4, scoped, tag = 'scoped memory for tpu_custom_call.1']
    %13 = vsyncpa [#allocation3], 0
    // Predicated region
    $region2: #{tpu_custom_call.1} parent=1 // pred_check
      _
    $region3: #{tpu_custom_call.1} parent=1 // pred_check_branch
      %15 = sbr.rel (0) target = $region5
    $region4: #{tpu_custom_call.1} parent=1 // pred_region
      _
    $region5: #{tpu_custom_call.1} parent=1 // pred_fallthru
      _
    // Predicated region
    $region6: #{tpu_custom_call.1} parent=1 // pred_check
      _
    $region7: #{tpu_custom_call.1} parent=1 // pred_check_branch
      %17 = sbr.rel (0) target = $region9
    $region8: #{tpu_custom_call.1} parent=1 // pred_region
      _
    $region9: #{tpu_custom_call.1} parent=1 // pred_fallthru
      _
    // Predicated region
    $region10: #{tpu_custom_call.1} parent=1 // pred_check
      _
    $region11: #{tpu_custom_call.1} parent=1 // pred_check_branch
      %19 = sbr.rel (0) target = $region13
    $region12: #{tpu_custom_call.1} parent=1 // pred_region
      _
    $region13: #{tpu_custom_call.1} parent=1 // pred_fallthru
      _
    // Predicated region
    $region14: #{tpu_custom_call.1} parent=1 // pred_check
      _
    $region15: #{tpu_custom_call.1} parent=1 // pred_check_branch
      %21 = sbr.rel (0) target = $region17
    $region16: #{tpu_custom_call.1} parent=1 // pred_region
      _
    $region17: #{tpu_custom_call.1} parent=1 // pred_fallthru
      _
    // Predicated region
    $region18: #{tpu_custom_call.1} parent=1 // pred_check
      _
    $region19: #{tpu_custom_call.1} parent=1 // pred_check_branch
      %23 = sbr.rel (0) target = $region21
    $region20: #{tpu_custom_call.1} parent=1 // pred_region
      _
    $region21: #{tpu_custom_call.1} parent=1 // pred_fallthru
      _
    // Predicated region
    $region22: #{tpu_custom_call.1} parent=1 // pred_check
      _
    $region23: #{tpu_custom_call.1} parent=1 // pred_check_branch
      %25 = sbr.rel (0) target = $region25
    $region24: #{tpu_custom_call.1} parent=1 // pred_region
      _
    $region25: #{tpu_custom_call.1} parent=1 // pred_fallthru
      _
    // Predicated region
    $region26: #{tpu_custom_call.1} parent=1 // pred_check
      _
    $region27: #{tpu_custom_call.1} parent=1 // pred_check_branch
      %27 = sbr.rel (0) target = $region29
    $region28: #{tpu_custom_call.1} parent=1 // pred_region
      _
    $region29: #{tpu_custom_call.1} parent=1 // pred_fallthru
      _
    // Predicated region
    $region30: #{tpu_custom_call.1} parent=1 // pred_check
      _
    $region31: #{tpu_custom_call.1} parent=1 // pred_check_branch
      %29 = sbr.rel (0) target = $region33
    $region32: #{tpu_custom_call.1} parent=1 // pred_region
      _
    $region33: #{tpu_custom_call.1} parent=1 // pred_fallthru
      _
    %v30 = vld [vmem:[%s0] sm:$0xff]
    %v31 = vld [vmem:[%s0 + $0x8] sm:$0xff]
    %v32 = vld [vmem:[%s0 + $0x10] sm:$0xff]
    %v33 = vld [vmem:[%s0 + $0x18] sm:$0xff]
    %v34 = vld [vmem:[%s1] sm:$0xff]
    %v35 = vld [vmem:[%s1 + $0x8] sm:$0xff]
    %v36 = vld [vmem:[%s1 + $0x10] sm:$0xff]
    %v37 = vld [vmem:[%s1 + $0x18] sm:$0xff]
    %42 = vrot.lane.b32.xlu0 %v34, 32
    %v43 = vpop.permute.xlu0 %42
    %44 = vrot.lane.b32.xlu0 %v35, 32
    %v45 = vpop.permute.xlu0 %44
    %46 = vrot.lane.b32.xlu0 %v36, 32
    %v47 = vpop.permute.xlu0 %46
    %48 = vrot.lane.b32.xlu0 %v37, 32
    %v49 = vpop.permute.xlu0 %48
    %54 = vrot.lane.b32.xlu0 %v34, 64
    %v55 = vpop.permute.xlu0 %54
    %56 = vrot.lane.b32.xlu0 %v35, 64
    %v57 = vpop.permute.xlu0 %56
    %58 = vrot.lane.b32.xlu0 %v36, 64
    %v59 = vpop.permute.xlu0 %58
    %60 = vrot.lane.b32.xlu0 %v37, 64
    %v61 = vpop.permute.xlu0 %60
    %66 = vrot.lane.b32.xlu0 %v34, 96
    %v67 = vpop.permute.xlu0 %66
    %68 = vrot.lane.b32.xlu0 %v35, 96
    %v69 = vpop.permute.xlu0 %68
    %70 = vrot.lane.b32.xlu0 %v36, 96
    %v71 = vpop.permute.xlu0 %70
    %72 = vrot.lane.b32.xlu0 %v37, 96
    %v73 = vpop.permute.xlu0 %72
    %vm78 = vcmask 261120
    %v79 = vsel %vm78, %v34, %v43
    %v80 = vsel %vm78, %v35, %v45
    %v81 = vsel %vm78, %v36, %v47
    %v82 = vsel %vm78, %v37, %v49
    %vm83 = vcmask 523264
    %v84 = vsel %vm83, %v79, %v55
    %v85 = vsel %vm83, %v80, %v57
    %v86 = vsel %vm83, %v81, %v59
    %v87 = vsel %vm83, %v82, %v61
    %vm88 = vcmask 785408
    %v89 = vsel %vm88, %v84, %v67
    %v90 = vsel %vm88, %v85, %v69
    %v91 = vsel %vm88, %v86, %v71
    %v92 = vsel %vm88, %v87, %v73
    %v93 = vld [vmem:[%s2] sm:$0xff]
    %v94 = vld [vmem:[%s2 + $0x8] sm:$0xff]
    %v95 = vld [vmem:[%s2 + $0x10] sm:$0xff]
    %v96 = vld [vmem:[%s2 + $0x18] sm:$0xff]
    %v98 = vsel %vm78, %v30, 0
    %v101 = vsel %vm78, %v31, 0
    %v104 = vsel %vm78, %v32, 0
    %v107 = vsel %vm78, %v33, 0
    %109 = vmatprep.subr.mxu0 0.0
    %110 = vmatpush1.msra.mxu0 %v93
    %111 = vmatprep.subr.mxu0 0.0
    %112 = vmatpush1.msra.mxu0 %v94
    %113 = vmatprep.subr.mxu0 0.0
    %114 = vmatpush1.msra.mxu0 %v95
    %115 = vmatprep.subr.mxu0 0.0
    %116 = vmatpush1.msra.mxu0 %v96
    %117 = vmatprep.subr.mxu0 0.0
    %118 = vmatpush1.msra.mxu0 0.0
    %119 = vmatprep.subr.mxu0 0.0
    %120 = vmatpush1.msra.mxu0 0.0
    %121 = vmatprep.subr.mxu0 0.0
    %122 = vmatpush1.msra.mxu0 0.0
    %123 = vmatprep.subr.mxu0 0.0
    %124 = vmatpush1.msra.mxu0 0.0
    %125 = vmatprep.subr.mxu0 0.0
    %126 = vmatpush1.msra.mxu0 0.0
    %127 = vmatprep.subr.mxu0 0.0
    %128 = vmatpush1.msra.mxu0 0.0
    %129 = vmatprep.subr.mxu0 0.0
    %130 = vmatpush1.msra.mxu0 0.0
    %131 = vmatprep.subr.mxu0 0.0
    %132 = vmatpush1.msra.mxu0 0.0
    %133 = vmatprep.subr.mxu0 0.0
    %134 = vmatpush1.msra.mxu0 0.0
    %135 = vmatprep.subr.mxu0 0.0
    %136 = vmatpush1.msra.mxu0 0.0
    %137 = vmatprep.subr.mxu0 0.0
    %138 = vmatpush1.msra.mxu0 0.0
    %139 = vmatprep.subr.mxu0 0.0
    %140 = vmatpush1.msra.mxu0 0.0
    %141 = vmatprep.subr.mxu0 0.0
    %142 = vmatpush1.msra.mxu0 0.0
    %143 = vmatprep.subr.mxu0 0.0
    %144 = vmatpush1.msra.mxu0 0.0
    %145 = vmatprep.subr.mxu0 0.0
    %146 = vmatpush1.msra.mxu0 0.0
    %147 = vmatprep.subr.mxu0 0.0
    %148 = vmatpush1.msra.mxu0 0.0
    %149 = vmatprep.subr.mxu0 0.0
    %150 = vmatpush1.msra.mxu0 0.0
    %151 = vmatprep.subr.mxu0 0.0
    %152 = vmatpush1.msra.mxu0 0.0
    %153 = vmatprep.subr.mxu0 0.0
    %154 = vmatpush1.msra.mxu0 0.0
    %155 = vmatprep.subr.mxu0 0.0
    %156 = vmatpush1.msra.mxu0 0.0
    %157 = vmatprep.subr.mxu0 0.0
    %158 = vmatpush1.msra.mxu0 0.0
    %159 = vmatprep.subr.mxu0 0.0
    %160 = vmatpush1.msra.mxu0 0.0
    %161 = vmatprep.subr.mxu0 0.0
    %162 = vmatpush1.msra.mxu0 0.0
    %163 = vmatprep.subr.mxu0 0.0
    %164 = vmatpush1.msra.mxu0 0.0
    %165 = vmatprep.subr.mxu0 0.0
    %166 = vmatpush1.msra.mxu0 0.0
    %167 = vmatprep.subr.mxu0 0.0
    %168 = vmatpush1.msra.mxu0 0.0
    %169 = vmatprep.subr.mxu0 0.0
    %170 = vmatpush1.msra.mxu0 0.0
    %171 = vmatprep.subr.mxu0 0.0
    %172 = vmatpush1.msra.mxu0 0.0
    %173 = vmatprep.mubr.f32.mxu0 0.0
    %174 = vmatmul.mubr.f32.gmra.mrb[0].mxu0 %v98
    %v175 = vpop.f32.mrb[0].mxu0
    %v176 = vadd.f32 0.0, %v175
    %v177 = vpop.f32.mrb[0].mxu0
    %178 = vmatprep.mubr.f32.mxu0 0.0
    %179 = vmatmul.mubr.f32.gmra.mrb[0].mxu0 %v101
    %v180 = vpop.f32.mrb[0].mxu0
    %v181 = vadd.f32 0.0, %v180
    %v182 = vpop.f32.mrb[0].mxu0
    %183 = vmatprep.mubr.f32.mxu0 0.0
    %184 = vmatmul.mubr.f32.gmra.mrb[0].mxu0 %v104
    %v185 = vpop.f32.mrb[0].mxu0
    %v186 = vadd.f32 0.0, %v185
    %v187 = vpop.f32.mrb[0].mxu0
    %188 = vmatprep.mubr.f32.mxu0 0.0
    %189 = vmatmul.mubr.f32.gmra.mrb[0].mxu0 %v107
    %v190 = vpop.f32.mrb[0].mxu0
    %v191 = vadd.f32 0.0, %v190
    %v192 = vpop.f32.mrb[0].mxu0
    %193 = vdwg.mxu0
    %v194 = vld [vmem:[%s3] sm:$0xff]
    %v195 = vld [vmem:[%s3 + $0x8] sm:$0xff]
    %v196 = vld [vmem:[%s3 + $0x10] sm:$0xff]
    %v197 = vld [vmem:[%s3 + $0x18] sm:$0xff]
    %v198 = vld [vmem:[%s4] sm:$0xff]
    %v199 = vld [vmem:[%s4 + $0x8] sm:$0xff]
    %v200 = vld [vmem:[%s4 + $0x10] sm:$0xff]
    %v201 = vld [vmem:[%s4 + $0x18] sm:$0xff]
    %v202 = vsel %vm78, %v34, 0
    %v204 = vsel %vm78, %v35, 0
    %v206 = vsel %vm78, %v36, 0
    %v208 = vsel %vm78, %v37, 0
    %210 = vmatprep.subr.mxu0 0.0
    %211 = vmatpush1.msra.mxu0 %v198
    %212 = vmatprep.subr.mxu0 0.0
    %213 = vmatpush1.msra.mxu0 %v199
    %214 = vmatprep.subr.mxu0 0.0
    %215 = vmatpush1.msra.mxu0 %v200
    %216 = vmatprep.subr.mxu0 0.0
    %217 = vmatpush1.msra.mxu0 %v201
    %218 = vmatprep.subr.mxu0 0.0
    %219 = vmatpush1.msra.mxu0 0.0
    %220 = vmatprep.subr.mxu0 0.0
    %221 = vmatpush1.msra.mxu0 0.0
    %222 = vmatprep.subr.mxu0 0.0
    %223 = vmatpush1.msra.mxu0 0.0
    %224 = vmatprep.subr.mxu0 0.0
    %225 = vmatpush1.msra.mxu0 0.0
    %226 = vmatprep.subr.mxu0 0.0
    %227 = vmatpush1.msra.mxu0 0.0
    %228 = vmatprep.subr.mxu0 0.0
    %229 = vmatpush1.msra.mxu0 0.0
    %230 = vmatprep.subr.mxu0 0.0
    %231 = vmatpush1.msra.mxu0 0.0
    %232 = vmatprep.subr.mxu0 0.0
    %233 = vmatpush1.msra.mxu0 0.0
    %234 = vmatprep.subr.mxu0 0.0
    %235 = vmatpush1.msra.mxu0 0.0
    %236 = vmatprep.subr.mxu0 0.0
    %237 = vmatpush1.msra.mxu0 0.0
    %238 = vmatprep.subr.mxu0 0.0
    %239 = vmatpush1.msra.mxu0 0.0
    %240 = vmatprep.subr.mxu0 0.0
    %241 = vmatpush1.msra.mxu0 0.0
    %242 = vmatprep.subr.mxu0 0.0
    %243 = vmatpush1.msra.mxu0 0.0
    %244 = vmatprep.subr.mxu0 0.0
    %245 = vmatpush1.msra.mxu0 0.0
    %246 = vmatprep.subr.mxu0 0.0
    %247 = vmatpush1.msra.mxu0 0.0
    %248 = vmatprep.subr.mxu0 0.0
    %249 = vmatpush1.msra.mxu0 0.0
    %250 = vmatprep.subr.mxu0 0.0
    %251 = vmatpush1.msra.mxu0 0.0
    %252 = vmatprep.subr.mxu0 0.0
    %253 = vmatpush1.msra.mxu0 0.0
    %254 = vmatprep.subr.mxu0 0.0
    %255 = vmatpush1.msra.mxu0 0.0
    %256 = vmatprep.subr.mxu0 0.0
    %257 = vmatpush1.msra.mxu0 0.0
    %258 = vmatprep.subr.mxu0 0.0
    %259 = vmatpush1.msra.mxu0 0.0
    %260 = vmatprep.subr.mxu0 0.0
    %261 = vmatpush1.msra.mxu0 0.0
    %262 = vmatprep.subr.mxu0 0.0
    %263 = vmatpush1.msra.mxu0 0.0
    %264 = vmatprep.subr.mxu0 0.0
    %265 = vmatpush1.msra.mxu0 0.0
    %266 = vmatprep.subr.mxu0 0.0
    %267 = vmatpush1.msra.mxu0 0.0
    %268 = vmatprep.subr.mxu0 0.0
    %269 = vmatpush1.msra.mxu0 0.0
    %270 = vmatprep.subr.mxu0 0.0
    %271 = vmatpush1.msra.mxu0 0.0
    %272 = vmatprep.subr.mxu0 0.0
    %273 = vmatpush1.msra.mxu0 0.0
    %274 = vmatprep.mubr.f32.mxu0 0.0
    %275 = vmatmul.mubr.f32.gmra.mrb[0].mxu0 %v202
    %v276 = vpop.f32.mrb[0].mxu0
    %v277 = vadd.f32 0.0, %v276
    %v278 = vpop.f32.mrb[0].mxu0
    %279 = vmatprep.mubr.f32.mxu0 0.0
    %280 = vmatmul.mubr.f32.gmra.mrb[0].mxu0 %v204
    %v281 = vpop.f32.mrb[0].mxu0
    %v282 = vadd.f32 0.0, %v281
    %v283 = vpop.f32.mrb[0].mxu0
    %284 = vmatprep.mubr.f32.mxu0 0.0
    %285 = vmatmul.mubr.f32.gmra.mrb[0].mxu0 %v206
    %v286 = vpop.f32.mrb[0].mxu0
    %v287 = vadd.f32 0.0, %v286
    %v288 = vpop.f32.mrb[0].mxu0
    %289 = vmatprep.mubr.f32.mxu0 0.0
    %290 = vmatmul.mubr.f32.gmra.mrb[0].mxu0 %v208
    %v291 = vpop.f32.mrb[0].mxu0
    %v292 = vadd.f32 0.0, %v291
    %v293 = vpop.f32.mrb[0].mxu0
    %294 = vdwg.mxu0
    %295 = vmatprep.subr.mxu0 0.0
    %296 = vmatpush1.msra.mxu0 %v194
    %297 = vmatprep.subr.mxu0 0.0
    %298 = vmatpush1.msra.mxu0 %v195
    %299 = vmatprep.subr.mxu0 0.0
    %300 = vmatpush1.msra.mxu0 %v196
    %301 = vmatprep.subr.mxu0 0.0
    %302 = vmatpush1.msra.mxu0 %v197
    %303 = vmatprep.subr.mxu0 0.0
    %304 = vmatpush1.msra.mxu0 0.0
    %305 = vmatprep.subr.mxu0 0.0
    %306 = vmatpush1.msra.mxu0 0.0
    %307 = vmatprep.subr.mxu0 0.0
    %308 = vmatpush1.msra.mxu0 0.0
    %309 = vmatprep.subr.mxu0 0.0
    %310 = vmatpush1.msra.mxu0 0.0
    %311 = vmatprep.subr.mxu0 0.0
    %312 = vmatpush1.msra.mxu0 0.0
    %313 = vmatprep.subr.mxu0 0.0
    %314 = vmatpush1.msra.mxu0 0.0
    %315 = vmatprep.subr.mxu0 0.0
    %316 = vmatpush1.msra.mxu0 0.0
    %317 = vmatprep.subr.mxu0 0.0
    %318 = vmatpush1.msra.mxu0 0.0
    %319 = vmatprep.subr.mxu0 0.0
    %320 = vmatpush1.msra.mxu0 0.0
    %321 = vmatprep.subr.mxu0 0.0
    %322 = vmatpush1.msra.mxu0 0.0
    %323 = vmatprep.subr.mxu0 0.0
    %324 = vmatpush1.msra.mxu0 0.0
    %325 = vmatprep.subr.mxu0 0.0
    %326 = vmatpush1.msra.mxu0 0.0
    %327 = vmatprep.subr.mxu0 0.0
    %328 = vmatpush1.msra.mxu0 0.0
    %329 = vmatprep.subr.mxu0 0.0
    %330 = vmatpush1.msra.mxu0 0.0
    %331 = vmatprep.subr.mxu0 0.0
    %332 = vmatpush1.msra.mxu0 0.0
    %333 = vmatprep.subr.mxu0 0.0
    %334 = vmatpush1.msra.mxu0 0.0
    %335 = vmatprep.subr.mxu0 0.0
    %336 = vmatpush1.msra.mxu0 0.0
    %337 = vmatprep.subr.mxu0 0.0
    %338 = vmatpush1.msra.mxu0 0.0
    %339 = vmatprep.subr.mxu0 0.0
    %340 = vmatpush1.msra.mxu0 0.0
    %341 = vmatprep.subr.mxu0 0.0
    %342 = vmatpush1.msra.mxu0 0.0
    %343 = vmatprep.subr.mxu0 0.0
    %344 = vmatpush1.msra.mxu0 0.0
    %345 = vmatprep.subr.mxu0 0.0
    %346 = vmatpush1.msra.mxu0 0.0
    %347 = vmatprep.subr.mxu0 0.0
    %348 = vmatpush1.msra.mxu0 0.0
    %349 = vmatprep.subr.mxu0 0.0
    %350 = vmatpush1.msra.mxu0 0.0
    %351 = vmatprep.subr.mxu0 0.0
    %352 = vmatpush1.msra.mxu0 0.0
    %353 = vmatprep.subr.mxu0 0.0
    %354 = vmatpush1.msra.mxu0 0.0
    %355 = vmatprep.subr.mxu0 0.0
    %356 = vmatpush1.msra.mxu0 0.0
    %357 = vmatprep.subr.mxu0 0.0
    %358 = vmatpush1.msra.mxu0 0.0
    %359 = vmatprep.mubr.f32.mxu0 0.0
    %360 = vmatmul.mubr.f32.gmra.mrb[0].mxu0 %v98
    %v361 = vpop.f32.mrb[0].mxu0
    %v362 = vadd.f32 %v277, %v361
    %v363 = vpop.f32.mrb[0].mxu0
    %364 = vmatprep.mubr.f32.mxu0 0.0
    %365 = vmatmul.mubr.f32.gmra.mrb[0].mxu0 %v101
    %v366 = vpop.f32.mrb[0].mxu0
    %v367 = vadd.f32 %v282, %v366
    %v368 = vpop.f32.mrb[0].mxu0
    %369 = vmatprep.mubr.f32.mxu0 0.0
    %370 = vmatmul.mubr.f32.gmra.mrb[0].mxu0 %v104
    %v371 = vpop.f32.mrb[0].mxu0
    %v372 = vadd.f32 %v287, %v371
    %v373 = vpop.f32.mrb[0].mxu0
    %374 = vmatprep.mubr.f32.mxu0 0.0
    %375 = vmatmul.mubr.f32.gmra.mrb[0].mxu0 %v107
    %v376 = vpop.f32.mrb[0].mxu0
    %v377 = vadd.f32 %v292, %v376
    %v378 = vpop.f32.mrb[0].mxu0
    %379 = vdwg.mxu0
    %v380 = vmul.f32 %v176, %v89
    %v381 = vmul.f32 %v181, %v90
    %v382 = vmul.f32 %v186, %v91
    %v383 = vmul.f32 %v191, %v92
    %v384 = vld [vmem:[%s6] sm:$0xff]
    %v385 = vld [vmem:[%s6 + $0x8] sm:$0xff]
    %v386 = vld [vmem:[%s6 + $0x10] sm:$0xff]
    %v387 = vld [vmem:[%s6 + $0x18] sm:$0xff]
    %v388 = vld [vmem:[%s6 + $0x20] sm:$0xff]
    %v389 = vld [vmem:[%s6 + $0x28] sm:$0xff]
    %v390 = vld [vmem:[%s6 + $0x30] sm:$0xff]
    %v391 = vld [vmem:[%s6 + $0x38] sm:$0xff]
    %v392 = vld [vmem:[%s6 + $0x40] sm:$0xff]
    %v393 = vld [vmem:[%s6 + $0x48] sm:$0xff]
    %v394 = vld [vmem:[%s6 + $0x50] sm:$0xff]
    %v395 = vld [vmem:[%s6 + $0x58] sm:$0xff]
    %v396 = vld [vmem:[%s6 + $0x60] sm:$0xff]
    %v397 = vld [vmem:[%s6 + $0x68] sm:$0xff]
    %v398 = vld [vmem:[%s6 + $0x70] sm:$0xff]
    %v399 = vld [vmem:[%s6 + $0x78] sm:$0xff]
    %400 = vmatprep.subr.mxu0 0.0
    %401 = vmatpush1.msra.mxu0 %v384
    %402 = vmatprep.subr.mxu0 0.0
    %403 = vmatpush1.msra.mxu0 %v385
    %404 = vmatprep.subr.mxu0 0.0
    %405 = vmatpush1.msra.mxu0 %v386
    %406 = vmatprep.subr.mxu0 0.0
    %407 = vmatpush1.msra.mxu0 %v387
    %408 = vmatprep.subr.mxu0 0.0
    %409 = vmatpush1.msra.mxu0 %v388
    %410 = vmatprep.subr.mxu0 0.0
    %411 = vmatpush1.msra.mxu0 %v389
    %412 = vmatprep.subr.mxu0 0.0
    %413 = vmatpush1.msra.mxu0 %v390
    %414 = vmatprep.subr.mxu0 0.0
    %415 = vmatpush1.msra.mxu0 %v391
    %416 = vmatprep.subr.mxu0 0.0
    %417 = vmatpush1.msra.mxu0 %v392
    %418 = vmatprep.subr.mxu0 0.0
    %419 = vmatpush1.msra.mxu0 %v393
    %420 = vmatprep.subr.mxu0 0.0
    %421 = vmatpush1.msra.mxu0 %v394
    %422 = vmatprep.subr.mxu0 0.0
    %423 = vmatpush1.msra.mxu0 %v395
    %424 = vmatprep.subr.mxu0 0.0
    %425 = vmatpush1.msra.mxu0 %v396
    %426 = vmatprep.subr.mxu0 0.0
    %427 = vmatpush1.msra.mxu0 %v397
    %428 = vmatprep.subr.mxu0 0.0
    %429 = vmatpush1.msra.mxu0 %v398
    %430 = vmatprep.subr.mxu0 0.0
    %431 = vmatpush1.msra.mxu0 %v399
    %432 = vmatprep.subr.mxu0 0.0
    %433 = vmatpush1.msra.mxu0 0.0
    %434 = vmatprep.subr.mxu0 0.0
    %435 = vmatpush1.msra.mxu0 0.0
    %436 = vmatprep.subr.mxu0 0.0
    %437 = vmatpush1.msra.mxu0 0.0
    %438 = vmatprep.subr.mxu0 0.0
    %439 = vmatpush1.msra.mxu0 0.0
    %440 = vmatprep.subr.mxu0 0.0
    %441 = vmatpush1.msra.mxu0 0.0
    %442 = vmatprep.subr.mxu0 0.0
    %443 = vmatpush1.msra.mxu0 0.0
    %444 = vmatprep.subr.mxu0 0.0
    %445 = vmatpush1.msra.mxu0 0.0
    %446 = vmatprep.subr.mxu0 0.0
    %447 = vmatpush1.msra.mxu0 0.0
    %448 = vmatprep.subr.mxu0 0.0
    %449 = vmatpush1.msra.mxu0 0.0
    %450 = vmatprep.subr.mxu0 0.0
    %451 = vmatpush1.msra.mxu0 0.0
    %452 = vmatprep.subr.mxu0 0.0
    %453 = vmatpush1.msra.mxu0 0.0
    %454 = vmatprep.subr.mxu0 0.0
    %455 = vmatpush1.msra.mxu0 0.0
    %456 = vmatprep.subr.mxu0 0.0
    %457 = vmatpush1.msra.mxu0 0.0
    %458 = vmatprep.subr.mxu0 0.0
    %459 = vmatpush1.msra.mxu0 0.0
    %460 = vmatprep.subr.mxu0 0.0
    %461 = vmatpush1.msra.mxu0 0.0
    %462 = vmatprep.subr.mxu0 0.0
    %463 = vmatpush1.msra.mxu0 0.0
    %464 = vmatprep.mubr.f32.mxu0 0.0
    %465 = vmatmul.mubr.f32.gmra.mrb[0].mxu0 %v380
    %v466 = vpop.f32.mrb[0].mxu0
    %v467 = vadd.f32 %v362, %v466
    %v468 = vpop.f32.mrb[0].mxu0
    %469 = vmatprep.mubr.f32.mxu0 0.0
    %470 = vmatmul.mubr.f32.gmra.mrb[0].mxu0 %v381
    %v471 = vpop.f32.mrb[0].mxu0
    %v472 = vadd.f32 %v367, %v471
    %v473 = vpop.f32.mrb[0].mxu0
    %474 = vmatprep.mubr.f32.mxu0 0.0
    %475 = vmatmul.mubr.f32.gmra.mrb[0].mxu0 %v382
    %v476 = vpop.f32.mrb[0].mxu0
    %v477 = vadd.f32 %v372, %v476
    %v478 = vpop.f32.mrb[0].mxu0
    %479 = vmatprep.mubr.f32.mxu0 0.0
    %480 = vmatmul.mubr.f32.gmra.mrb[0].mxu0 %v383
    %v481 = vpop.f32.mrb[0].mxu0
    %v482 = vadd.f32 %v377, %v481
    %v483 = vpop.f32.mrb[0].mxu0
    %484 = vdwg.mxu0
    %v485 = vld [vmem:[%s5] sm:$0x1]
    %v487 = vlaneseq
    %v488 = vshrl.u32 %v487, 7
    %v489 = vsub.s32 0, %v488
    %v490 = vrot.slane %v485, %v489
    %v492 = vadd.f32 %v467, %v490
    %v493 = vadd.f32 %v472, %v490
    %v494 = vadd.f32 %v477, %v490
    %v495 = vadd.f32 %v482, %v490
    %vm496 = vcmask 31744
    %v497 = vsel %vm496, %v492, -inf
    %v498 = vrot.slane %v497, 4
    %v499 = vmax.f32 %v497, %v498
    %v500 = vrot.slane %v499, 2
    %v501 = vmax.f32 %v499, %v500
    %v502 = vrot.slane %v501, 1
    %v503 = vmax.f32 %v501, %v502
    %v504 = vsel %vm496, %v493, -inf
    %v505 = vrot.slane %v504, 4
    %v506 = vmax.f32 %v504, %v505
    %v507 = vrot.slane %v506, 2
    %v508 = vmax.f32 %v506, %v507
    %v509 = vrot.slane %v508, 1
    %v510 = vmax.f32 %v508, %v509
    %v511 = vsel %vm496, %v494, -inf
    %v512 = vrot.slane %v511, 4
    %v513 = vmax.f32 %v511, %v512
    %v514 = vrot.slane %v513, 2
    %v515 = vmax.f32 %v513, %v514
    %v516 = vrot.slane %v515, 1
    %v517 = vmax.f32 %v515, %v516
    %v518 = vsel %vm496, %v495, -inf
    %v519 = vrot.slane %v518, 4
    %v520 = vmax.f32 %v518, %v519
    %v521 = vrot.slane %v520, 2
    %v522 = vmax.f32 %v520, %v521
    %v523 = vrot.slane %v522, 1
    %v524 = vmax.f32 %v522, %v523
    %v525 = vsub.f32 %v492, %v503
    %v526 = vsub.f32 %v493, %v510
    %v527 = vsub.f32 %v494, %v517
    %v528 = vsub.f32 %v495, %v524
    %v529 = vmul.f32 %v525, 1.442695
    %v530 = vpow.pop %v529
    %v531 = vmul.f32 %v526, 1.442695
    %v532 = vpow.pop %v531
    %v533 = vmul.f32 %v527, 1.442695
    %v534 = vpow.pop %v533
    %v535 = vmul.f32 %v528, 1.442695
    %v536 = vpow.pop %v535
    %v537 = vsel %vm496, %v530, 0.0
    %v538 = vrot.slane %v537, 4
    %v539 = vadd.f32 %v537, %v538
    %v540 = vrot.slane %v539, 2
    %v541 = vadd.f32 %v539, %v540
    %v542 = vrot.slane %v541, 1
    %v543 = vadd.f32 %v541, %v542
    %v544 = vsel %vm496, %v532, 0.0
    %v545 = vrot.slane %v544, 4
    %v546 = vadd.f32 %v544, %v545
    %v547 = vrot.slane %v546, 2
    %v548 = vadd.f32 %v546, %v547
    %v549 = vrot.slane %v548, 1
    %v550 = vadd.f32 %v548, %v549
    %v551 = vsel %vm496, %v534, 0.0
    %v552 = vrot.slane %v551, 4
    %v553 = vadd.f32 %v551, %v552
    %v554 = vrot.slane %v553, 2
    %v555 = vadd.f32 %v553, %v554
    %v556 = vrot.slane %v555, 1
    %v557 = vadd.f32 %v555, %v556
    %v558 = vsel %vm496, %v536, 0.0
    %v559 = vrot.slane %v558, 4
    %v560 = vadd.f32 %v558, %v559
    %v561 = vrot.slane %v560, 2
    %v562 = vadd.f32 %v560, %v561
    %v563 = vrot.slane %v562, 1
    %v564 = vadd.f32 %v562, %v563
    %v565 = vrcp.pop %v543
    %v566 = vrcp.pop %v550
    %v567 = vrcp.pop %v557
    %v568 = vrcp.pop %v564
    %v569 = vmul.f32 %v543, %v565
    %v570 = vmul.f32 %v550, %v566
    %v571 = vmul.f32 %v557, %v567
    %v572 = vmul.f32 %v564, %v568
    %v573 = vsub.f32 2.0, %v569
    %v574 = vsub.f32 2.0, %v570
    %v575 = vsub.f32 2.0, %v571
    %v576 = vsub.f32 2.0, %v572
    %v577 = vmul.f32 %v565, %v573
    %v578 = vmul.f32 %v566, %v574
    %v579 = vmul.f32 %v567, %v575
    %v580 = vmul.f32 %v568, %v576
    %v581 = vmul.f32 %v530, %v577
    %v582 = vmul.f32 %v532, %v578
    %v583 = vmul.f32 %v534, %v579
    %v584 = vmul.f32 %v536, %v580
    %v585 = vld [vmem:[%s7] sm:$0xf]
    %v587 = vsel %vm496, %v581, 0
    %v590 = vsel %vm496, %v582, 0
    %v593 = vsel %vm496, %v583, 0
    %v596 = vsel %vm496, %v584, 0
    %vm598 = vcmask 1043456
    %v600 = vsel %vm598, %v585, 0
    %602 = vmatprep.subr.mxu0 0.0
    %603 = vmatpush1.msra.mxu0 %v600
    %604 = vmatprep.subr.mxu0 0.0
    %605 = vmatpush1.msra.mxu0 0.0
    %606 = vmatprep.subr.mxu0 0.0
    %607 = vmatpush1.msra.mxu0 0.0
    %608 = vmatprep.subr.mxu0 0.0
    %609 = vmatpush1.msra.mxu0 0.0
    %610 = vmatprep.subr.mxu0 0.0
    %611 = vmatpush1.msra.mxu0 0.0
    %612 = vmatprep.subr.mxu0 0.0
    %613 = vmatpush1.msra.mxu0 0.0
    %614 = vmatprep.subr.mxu0 0.0
    %615 = vmatpush1.msra.mxu0 0.0
    %616 = vmatprep.subr.mxu0 0.0
    %617 = vmatpush1.msra.mxu0 0.0
    %618 = vmatprep.subr.mxu0 0.0
    %619 = vmatpush1.msra.mxu0 0.0
    %620 = vmatprep.subr.mxu0 0.0
    %621 = vmatpush1.msra.mxu0 0.0
    %622 = vmatprep.subr.mxu0 0.0
    %623 = vmatpush1.msra.mxu0 0.0
    %624 = vmatprep.subr.mxu0 0.0
    %625 = vmatpush1.msra.mxu0 0.0
    %626 = vmatprep.subr.mxu0 0.0
    %627 = vmatpush1.msra.mxu0 0.0
    %628 = vmatprep.subr.mxu0 0.0
    %629 = vmatpush1.msra.mxu0 0.0
    %630 = vmatprep.subr.mxu0 0.0
    %631 = vmatpush1.msra.mxu0 0.0
    %632 = vmatprep.subr.mxu0 0.0
    %633 = vmatpush1.msra.mxu0 0.0
    %634 = vmatprep.subr.mxu0 0.0
    %635 = vmatpush1.msra.mxu0 0.0
    %636 = vmatprep.subr.mxu0 0.0
    %637 = vmatpush1.msra.mxu0 0.0
    %638 = vmatprep.subr.mxu0 0.0
    %639 = vmatpush1.msra.mxu0 0.0
    %640 = vmatprep.subr.mxu0 0.0
    %641 = vmatpush1.msra.mxu0 0.0
    %642 = vmatprep.subr.mxu0 0.0
    %643 = vmatpush1.msra.mxu0 0.0
    %644 = vmatprep.subr.mxu0 0.0
    %645 = vmatpush1.msra.mxu0 0.0
    %646 = vmatprep.subr.mxu0 0.0
    %647 = vmatpush1.msra.mxu0 0.0
    %648 = vmatprep.subr.mxu0 0.0
    %649 = vmatpush1.msra.mxu0 0.0
    %650 = vmatprep.subr.mxu0 0.0
    %651 = vmatpush1.msra.mxu0 0.0
    %652 = vmatprep.subr.mxu0 0.0
    %653 = vmatpush1.msra.mxu0 0.0
    %654 = vmatprep.subr.mxu0 0.0
    %655 = vmatpush1.msra.mxu0 0.0
    %656 = vmatprep.subr.mxu0 0.0
    %657 = vmatpush1.msra.mxu0 0.0
    %658 = vmatprep.subr.mxu0 0.0
    %659 = vmatpush1.msra.mxu0 0.0
    %660 = vmatprep.subr.mxu0 0.0
    %661 = vmatpush1.msra.mxu0 0.0
    %662 = vmatprep.subr.mxu0 0.0
    %663 = vmatpush1.msra.mxu0 0.0
    %664 = vmatprep.subr.mxu0 0.0
    %665 = vmatpush1.msra.mxu0 0.0
    %666 = vmatprep.mubr.f32.mxu0 0.0
    %667 = vmatmul.mubr.f32.gmra.mrb[0].mxu0 %v587
    %v668 = vpop.f32.mrb[0].mxu0
    %v669 = vadd.f32 0.0, %v668
    %v670 = vpop.f32.mrb[0].mxu0
    %671 = vmatprep.mubr.f32.mxu0 0.0
    %672 = vmatmul.mubr.f32.gmra.mrb[0].mxu0 %v590
    %v673 = vpop.f32.mrb[0].mxu0
    %v674 = vadd.f32 0.0, %v673
    %v675 = vpop.f32.mrb[0].mxu0
    %676 = vmatprep.mubr.f32.mxu0 0.0
    %677 = vmatmul.mubr.f32.gmra.mrb[0].mxu0 %v593
    %v678 = vpop.f32.mrb[0].mxu0
    %v679 = vadd.f32 0.0, %v678
    %v680 = vpop.f32.mrb[0].mxu0
    %681 = vmatprep.mubr.f32.mxu0 0.0
    %682 = vmatmul.mubr.f32.gmra.mrb[0].mxu0 %v596
    %v683 = vpop.f32.mrb[0].mxu0
    %v684 = vadd.f32 0.0, %v683
    %v685 = vpop.f32.mrb[0].mxu0
    %686 = vdwg.mxu0
    %v687 = vmul.f32 %v669, %v89
    %v688 = vmul.f32 %v674, %v90
    %v689 = vmul.f32 %v679, %v91
    %v690 = vmul.f32 %v684, %v92
    %v691 = vrot.slane %v687, 4
    %v692 = vadd.f32 %v687, %v691
    %v693 = vrot.slane %v692, 2
    %v694 = vadd.f32 %v692, %v693
    %v695 = vrot.slane %v694, 1
    %v696 = vadd.f32 %v694, %v695
    %v697 = vrot.slane %v688, 4
    %v698 = vadd.f32 %v688, %v697
    %v699 = vrot.slane %v698, 2
    %v700 = vadd.f32 %v698, %v699
    %v701 = vrot.slane %v700, 1
    %v702 = vadd.f32 %v700, %v701
    %v703 = vrot.slane %v689, 4
    %v704 = vadd.f32 %v689, %v703
    %v705 = vrot.slane %v704, 2
    %v706 = vadd.f32 %v704, %v705
    %v707 = vrot.slane %v706, 1
    %v708 = vadd.f32 %v706, %v707
    %v709 = vrot.slane %v690, 4
    %v710 = vadd.f32 %v690, %v709
    %v711 = vrot.slane %v710, 2
    %v712 = vadd.f32 %v710, %v711
    %v713 = vrot.slane %v712, 1
    %v714 = vadd.f32 %v712, %v713
    %vm719 = vcmask 1041409
    %v720 = vsel %vm719, %v702, %v696
    %vm721 = vcmask 1042434
    %v722 = vsel %vm721, %v708, %v720
    %vm723 = vcmask 1043459
    %v724 = vsel %vm723, %v714, %v722
    %726 = vst [vmem:[#allocation2] sm:$0xf] %v724
    // Predicated region
    $region34: #{tpu_custom_call.1} parent=1 // pred_check
      _
    $region35: #{tpu_custom_call.1} parent=1 // pred_check_branch
      %728 = sbr.rel (0) target = $region37
    $region36: #{tpu_custom_call.1} parent=1 // pred_region
      %s730 = ssub.s32 64, 64
      %731 = vsyncadd [#allocation3], %s730
      %s733 = sshll.u32 [#allocation2], 4
      %s734 = int_to_ptr.vmem [resolvable:$true] %s733
      %736 = dma.vmem_to_hbm [thread:$0]  %s734, 64, %s8, [#allocation3]
    $region37: #{tpu_custom_call.1} parent=1 // pred_fallthru
      _
    // Predicated region
    $region38: #{tpu_custom_call.1} parent=1 // pred_check
      _
    $region39: #{tpu_custom_call.1} parent=1 // pred_check_branch
      %738 = sbr.rel (0) target = $region41
    $region40: #{tpu_custom_call.1} parent=1 // pred_region
      %739 = dma.done [#allocation3], 64
    $region41: #{tpu_custom_call.1} parent=1 // pred_fallthru
      _
    %740 = vsyncpa [#allocation3], 1

</llo_original>
